<compile_context>
chip_gen: v5e
topology: v5e:2x2
jax: 0.10.0
libtpu: 0.0.40
codegen_flags: <defaults>
</compile_context>

<pallas_src>
import functools

import numpy as np
import jax
import jax.numpy as jnp
from jax.experimental import pallas as pl
from jax.experimental.pallas import tpu as pltpu


def _round_up(x, m):
    return ((x + m - 1) // m) * m


# ----------------------------------------------------------------------------
# Pallas kernel: L fused (matmul + bias [+ ReLU]) layers on one row tile.
# ----------------------------------------------------------------------------
def _mlp_kernel(x_ref, w_ref, b_ref, o_ref, *, n_layers):
    x = x_ref[...]                                    # (TR, CP) f32, lane-dense
    for i in range(n_layers):                         # L small & static: unroll
        y = jnp.dot(x, w_ref[i],
                    preferred_element_type=jnp.float32) + b_ref[i]
        x = jnp.maximum(y, 0.0) if i < n_layers - 1 else y
    o_ref[...] = x.astype(o_ref.dtype)                # full-lane (128) store


@functools.partial(jax.jit, static_argnames=("c_out", "block_rows"))
def full_connected_conv3d_pallas(embeddings, w_slab, b_slab, c_out,
                                 *, block_rows=1024):
    """embeddings: (B, C0, D, H, W) f32.
    w_slab: (L, CP, CP) fused/padded weights.  b_slab: (L, 1, CP) biases.
    Returns (B, c_out, D, H, W)."""
    B, C0, D, H, W = embeddings.shape
    L, CP, _ = w_slab.shape
    R = B * D * H * W

    # channels-last; flatten batch+spatial into the matmul row dimension
    x = jnp.transpose(embeddings, (0, 2, 3, 4, 1)).reshape(R, C0)

    TR = min(block_rows, _round_up(R, 8))             # row tile (multiple of 8)
    Rp = _round_up(R, TR)                             # no partial row blocks
    x = jnp.pad(x, ((0, Rp - R), (0, CP - C0)))       # 128-lane-dense channels

    grid = (Rp // TR,)
    flops = 2 * Rp * CP * CP * L
    bytes_accessed = (Rp * CP + L * CP * CP + L * CP + Rp * CP) * 4

    out = pl.pallas_call(
        functools.partial(_mlp_kernel, n_layers=L),
        grid=grid,
        in_specs=[
            pl.BlockSpec((TR, CP), lambda r: (r, 0)),        # activations
            pl.BlockSpec((L, CP, CP), lambda r: (0, 0, 0)),  # weights (resident)
            pl.BlockSpec((L, 1, CP), lambda r: (0, 0, 0)),   # biases  (resident)
        ],
        out_specs=pl.BlockSpec((TR, CP), lambda r: (r, 0)),
        out_shape=jax.ShapeDtypeStruct((Rp, CP), jnp.float32),
        compiler_params=pltpu.CompilerParams(
            dimension_semantics=("parallel",)),              # megacore-friendly
        cost_estimate=pl.CostEstimate(flops=flops, transcendentals=0,
                                      bytes_accessed=bytes_accessed),
    )(x, w_slab, b_slab)

    out = out[:R, :c_out].reshape(B, D, H, W, c_out)
    return jnp.transpose(out, (0, 4, 1, 2, 3))


# ----------------------------------------------------------------------------
# Deterministic raw parameter init (conv + BatchNorm3d running stats).
# ----------------------------------------------------------------------------
def init_raw_params(key, channels):
    n_layers = len(channels)
    keys = jax.random.split(key, n_layers)
    layers = []
    for i in range(n_layers - 2):                      # conv + BN + ReLU blocks
        k = jax.random.split(keys[i], 6)
        cin, cout = channels[i], channels[i + 1]
        layers.append(dict(
            W=0.2 * jax.random.normal(k[0], (cin, cout), jnp.float32),
            b=0.1 * jax.random.normal(k[1], (cout,), jnp.float32),
            gamma=1.0 + 0.1 * jax.random.normal(k[2], (cout,), jnp.float32),
            beta=0.1 * jax.random.normal(k[3], (cout,), jnp.float32),
            mean=0.1 * jax.random.normal(k[4], (cout,), jnp.float32),
            var=jnp.abs(jax.random.normal(k[5], (cout,), jnp.float32)) + 0.5,
        ))
    k = jax.random.split(keys[-1], 2)
    cin, cout = channels[-2], channels[-1]
    layers.append(dict(                                 # plain outlayer conv
        W=0.2 * jax.random.normal(k[0], (cin, cout), jnp.float32),
        b=0.1 * jax.random.normal(k[1], (cout,), jnp.float32),
    ))
    return layers


def fuse_and_pack(layers, cp, eps=1e-5):
    """Fold eval-mode BatchNorm3d into the preceding 1x1x1 conv and zero-pad
    every layer into common (cp, cp) / (1, cp) slabs (2 kernel operands)."""
    L = len(layers)
    w_slab = np.zeros((L, cp, cp), dtype=np.float32)
    b_slab = np.zeros((L, 1, cp), dtype=np.float32)
    for i, p in enumerate(layers):
        Wm, b = np.asarray(p["W"]), np.asarray(p["b"])
        if "gamma" in p:                                # conv + BN fusion
            scale = np.asarray(p["gamma"]) / np.sqrt(np.asarray(p["var"]) + eps)
            Wm = Wm * scale[None, :]
            b = (b - np.asarray(p["mean"])) * scale + np.asarray(p["beta"])
        cin, cout = Wm.shape
        w_slab[i, :cin, :cout] = Wm
        b_slab[i, 0, :cout] = b
    return jnp.asarray(w_slab), jnp.asarray(b_slab)


# ----------------------------------------------------------------------------
# Pure-JAX UNFUSED eval-mode reference (conv -> BN(running stats) -> ReLU).
# ----------------------------------------------------------------------------
def reference_jax(embeddings, layers, eps=1e-5):
    x = jnp.transpose(embeddings, (0, 2, 3, 4, 1))     # (B, D, H, W, C)
    n = len(layers)
    for i, p in enumerate(layers):
        x = jnp.einsum("bdhwc,co->bdhwo", x, p["W"]) + p["b"]
        if i < n - 1:
            x = (x - p["mean"]) / jnp.sqrt(p["var"] + eps) * p["gamma"] + p["beta"]
            x = jnp.maximum(x, 0.0)                     # ReLU; Dropout3d eval = id
    return jnp.transpose(x, (0, 4, 1, 2, 3))            # (B, C_out, D, H, W)


# ----------------------------------------------------------------------------
if __name__ == "__main__":
    # small deterministic config: Conv3d input (B, C, D, H, W)
    B, D, H, W = 2, 8, 16, 16
    channels = [4, 32, 64, 32]                          # 2x(conv+BN+ReLU) + outlayer

    key = jax.random.PRNGKey(0)
    k_x, k_p = jax.random.split(key)
    embeddings = jax.random.normal(k_x, (B, channels[0], D, H, W),
                                   dtype=jnp.float32)

    layers = init_raw_params(k_p, channels)
    CP = _round_up(max(channels), 128)                  # lane-dense channel width
    w_slab, b_slab = fuse_and_pack(layers, CP)

    out = full_connected_conv3d_pallas(embeddings, w_slab, b_slab, channels[-1])
    out = jax.block_until_ready(out)                    # (B, 32, D, H, W)

    ref = reference_jax(embeddings, layers)
    assert out.shape == (B, channels[-1], D, H, W)
    np.testing.assert_allclose(np.asarray(out), np.asarray(ref),
                               rtol=2e-2, atol=2e-2)

    print("KERNEL_OK")
</pallas_src>

<mosaic_0001>
module attributes {stable_mosaic.version = 11 : i64} {
  func.func @_mlp_kernel(%arg0: i32, %arg1: memref<1024x128xf32, #tpu.memory_space<vmem>>, %arg2: memref<3x128x128xf32, #tpu.memory_space<vmem>>, %arg3: memref<3x1x128xf32, #tpu.memory_space<vmem>>, %arg4: memref<1024x128xf32, #tpu.memory_space<vmem>>) attributes {dimension_semantics = [#tpu.dimension_semantics<parallel>], iteration_bounds = array<i64: 4>, scalar_prefetch = 0 : i64, scratch_operands = 0 : i64, tpu.core_type = #tpu.core_type<tc>, window_params = [{transform_indices = @transform_0, window_bounds = array<i64: 1024, 128>}, {pipeline_mode = #tpu.pipeline_mode<synchronous>, transform_indices = @transform_1, window_bounds = array<i64: 3, 128, 128>}, {pipeline_mode = #tpu.pipeline_mode<synchronous>, transform_indices = @transform_2, window_bounds = array<i64: 3, 1, 128>}, {transform_indices = @transform_3, window_bounds = array<i64: 1024, 128>}]} {
    %c0 = arith.constant 0 : index
    %c0_0 = arith.constant 0 : index
    %0 = vector.load %arg1[%c0, %c0_0] : memref<1024x128xf32, #tpu.memory_space<vmem>>, vector<1024x128xf32>
    %c0_1 = arith.constant 0 : index
    %c0_2 = arith.constant 0 : index
    %c0_3 = arith.constant 0 : index
    %1 = vector.load %arg2[%c0_1, %c0_2, %c0_3] : memref<3x128x128xf32, #tpu.memory_space<vmem>>, vector<1x128x128xf32>
    %2 = vector.shape_cast %1 : vector<1x128x128xf32> to vector<128x128xf32>
    %cst = arith.constant dense<0.000000e+00> : vector<1024x128xf32>
    %3 = tpu.matmul %0, %2, %cst {dimension_numbers = #tpu.dot_dimension_numbers<[1], [0], [0], [1], [0, 0, 1, 1], [], []>} : vector<1024x128xf32>, vector<128x128xf32>, vector<1024x128xf32> -> vector<1024x128xf32>
    %c0_4 = arith.constant 0 : index
    %c0_5 = arith.constant 0 : index
    %c0_6 = arith.constant 0 : index
    %4 = vector.load %arg3[%c0_4, %c0_5, %c0_6] : memref<3x1x128xf32, #tpu.memory_space<vmem>>, vector<1x1x128xf32>
    %5 = vector.shape_cast %4 : vector<1x1x128xf32> to vector<1x128xf32>
    %6 = vector.broadcast %5 : vector<1x128xf32> to vector<1024x128xf32>
    %7 = arith.addf %3, %6 : vector<1024x128xf32>
    %cst_7 = arith.constant 0.000000e+00 : f32
    %8 = vector.broadcast %cst_7 : f32 to vector<1024x128xf32>
    %9 = arith.maximumf %7, %8 : vector<1024x128xf32>
    %c1 = arith.constant 1 : index
    %c0_8 = arith.constant 0 : index
    %c0_9 = arith.constant 0 : index
    %10 = vector.load %arg2[%c1, %c0_8, %c0_9] : memref<3x128x128xf32, #tpu.memory_space<vmem>>, vector<1x128x128xf32>
    %11 = vector.shape_cast %10 : vector<1x128x128xf32> to vector<128x128xf32>
    %cst_10 = arith.constant dense<0.000000e+00> : vector<1024x128xf32>
    %12 = tpu.matmul %9, %11, %cst_10 {dimension_numbers = #tpu.dot_dimension_numbers<[1], [0], [0], [1], [0, 0, 1, 1], [], []>} : vector<1024x128xf32>, vector<128x128xf32>, vector<1024x128xf32> -> vector<1024x128xf32>
    %c1_11 = arith.constant 1 : index
    %c0_12 = arith.constant 0 : index
    %c0_13 = arith.constant 0 : index
    %13 = vector.load %arg3[%c1_11, %c0_12, %c0_13] : memref<3x1x128xf32, #tpu.memory_space<vmem>>, vector<1x1x128xf32>
    %14 = vector.shape_cast %13 : vector<1x1x128xf32> to vector<1x128xf32>
    %15 = vector.broadcast %14 : vector<1x128xf32> to vector<1024x128xf32>
    %16 = arith.addf %12, %15 : vector<1024x128xf32>
    %cst_14 = arith.constant 0.000000e+00 : f32
    %17 = vector.broadcast %cst_14 : f32 to vector<1024x128xf32>
    %18 = arith.maximumf %16, %17 : vector<1024x128xf32>
    %c2 = arith.constant 2 : index
    %c0_15 = arith.constant 0 : index
    %c0_16 = arith.constant 0 : index
    %19 = vector.load %arg2[%c2, %c0_15, %c0_16] : memref<3x128x128xf32, #tpu.memory_space<vmem>>, vector<1x128x128xf32>
    %20 = vector.shape_cast %19 : vector<1x128x128xf32> to vector<128x128xf32>
    %cst_17 = arith.constant dense<0.000000e+00> : vector<1024x128xf32>
    %21 = tpu.matmul %18, %20, %cst_17 {dimension_numbers = #tpu.dot_dimension_numbers<[1], [0], [0], [1], [0, 0, 1, 1], [], []>} : vector<1024x128xf32>, vector<128x128xf32>, vector<1024x128xf32> -> vector<1024x128xf32>
    %c2_18 = arith.constant 2 : index
    %c0_19 = arith.constant 0 : index
    %c0_20 = arith.constant 0 : index
    %22 = vector.load %arg3[%c2_18, %c0_19, %c0_20] : memref<3x1x128xf32, #tpu.memory_space<vmem>>, vector<1x1x128xf32>
    %23 = vector.shape_cast %22 : vector<1x1x128xf32> to vector<1x128xf32>
    %24 = vector.broadcast %23 : vector<1x128xf32> to vector<1024x128xf32>
    %25 = arith.addf %21, %24 : vector<1024x128xf32>
    %c0_21 = arith.constant 0 : index
    %c0_22 = arith.constant 0 : index
    %26 = vector.load %arg4[%c0_21, %c0_22] : memref<1024x128xf32, #tpu.memory_space<vmem>>, vector<1024x128xf32>
    tpu.vector_store %arg4[%c0_21, %c0_22], %25 {strides = array<i32>} : memref<1024x128xf32, #tpu.memory_space<vmem>>, vector<1024x128xf32>,
    return
  }
  func.func @transform_0(%arg0: i32) -> (i32, i32) {
    %c0_i32 = arith.constant 0 : i32
    %c0_i32_0 = arith.constant 0 : i32
    return %arg0, %c0_i32 : i32, i32
  }
  func.func @transform_1(%arg0: i32) -> (i32, i32, i32) {
    %c0_i32 = arith.constant 0 : i32
    %c0_i32_0 = arith.constant 0 : i32
    %c0_i32_1 = arith.constant 0 : i32
    %c0_i32_2 = arith.constant 0 : i32
    return %c0_i32, %c0_i32_0, %c0_i32_1 : i32, i32, i32
  }
  func.func @transform_2(%arg0: i32) -> (i32, i32, i32) {
    %c0_i32 = arith.constant 0 : i32
    %c0_i32_0 = arith.constant 0 : i32
    %c0_i32_1 = arith.constant 0 : i32
    %c0_i32_2 = arith.constant 0 : i32
    return %c0_i32, %c0_i32_0, %c0_i32_1 : i32, i32, i32
  }
  func.func @transform_3(%arg0: i32) -> (i32, i32) {
    %c0_i32 = arith.constant 0 : i32
    %c0_i32_0 = arith.constant 0 : i32
    return %arg0, %c0_i32 : i32, i32
  }
}

</mosaic_0001>

<llo_original>
// kernel: full_connected_conv3d_pallas.1
$region0: #{full_connected_conv3d_pallas.1}
  #allocation0 [shape = 'u32[]', space=smem, size = 0x4, offset = 0x4, fixed_abs, tag = 'smem constant byte address 0x4 - core index']
  #allocation1 [shape = 'u32[72,128]{1,0:T(1,128)}', space=vmem, size = 0x9000, scoped, tag = 'internal scratch']
  %s0 = inlined_call_operand.vmem [shape: f32[4096,128], index: 0, kind: input, shape index: {}]
  %s1 = inlined_call_operand.vmem [shape: f32[3,128,128], index: 1, kind: input, shape index: {}]
  %s2 = inlined_call_operand.vmem [shape: f32[3,1,128], index: 2, kind: input, shape index: {}]
  %s3 = inlined_call_operand.hbm [shape: f32[4096,128], index: 3, kind: output, shape index: {}]
  %s4 = sld [smem:[#allocation0]]
  $region45: #{full_connected_conv3d_pallas.1} parent=0
    _
  %s6 = ssub.s32 1, %s4
  %s7 = scalar_select 0, %s6, %s4
  $region1: #{full_connected_conv3d_pallas.1} parent=0
    #allocation2 [shape = 'u8[1048576]{0}', space=vmem, size = 0x100000, scoped, tag = 'output window, operand 0']
    #allocation3 [shape = 's32[2]{0}', space=sflag, size = 0x8, scoped, tag = 'scoped memory for full_connected_conv3d_pallas.1']
    %8 = vsyncpa [#allocation3], 0
    %s9 = scalar_lea.sflag [#allocation3], 1
    %10 = vsyncpa %s9, 0
    loop: start=0, step=1, limit=6
    $region2: #{full_connected_conv3d_pallas.1} parent=1 // loop_pre_header
      _
    $region3: #{full_connected_conv3d_pallas.1} parent=1 // loop_header
      %s12 = sphi 0, %s16
      %p13 = scmp.ge.s32.totalorder %s12, 6
      %s22 = sphi 0, %s24
      %s25 = sphi 0, %s22
      %s26 = sphi 0, %s25
      %s42 = sphi 0, %s26
      %s46 = sphi 0, %s46
      %s48 = sphi 0, %s46
      %s49 = sphi 0, %s48
      %s63 = sphi 0, %s49
      %s67 = sphi 0, %s67
      %s69 = sphi 0, %s67
      %s70 = sphi 0, %s69
      %s84 = sphi 0, %s70
      %s90 = sphi 0, %s92
      %s93 = sphi 0, %s90
      %s94 = sphi 0, %s93
      %s110 = sphi 0, %s94
    $region4: #{full_connected_conv3d_pallas.1} parent=1 // loop_header_branch
      %15 = sbr.rel (%p13) target = $region8
    $region5: #{full_connected_conv3d_pallas.1} parent=1 // loop_body
      %s17 = ssub.s32 %s12, 1
      %s18 = ssub.s32 %s12, 2
      %s19 = sadd.s32 %s12, 1
      %s20 = ssub.s32 %s12, %s19
      %p21 = scmp.eq.s32.totalorder %s20, 0
      %s23 = sadd.s32 %s22, 1
      %s24 = scalar_select %p21, %s22, %s23
      %p27 = pneg %p21
      %p28 = scmp.eq.s32.totalorder %s12, 3
      %p29 = por %p27, %p28
      %p30 = scmp.ne.s32.totalorder %s22, %s25
      %p31 = scmp.eq.s32.totalorder %s12, 0
      %p32 = por %p30, %p31
      %p33 = scmp.ne.s32.totalorder %s22, %s25
      %p34 = scmp.eq.s32.totalorder %s17, 3
      %p35 = por %p33, %p34
      %p36 = scmp.ne.s32.totalorder %s25, %s26
      %p37 = scmp.eq.s32.totalorder %s17, 0
      %p38 = por %p36, %p37
      %p39 = scmp.ne.s32.totalorder %s25, %s26
      %p40 = scmp.eq.s32.totalorder %s18, 3
      %p41 = por %p39, %p40
      %p43 = scmp.ne.s32.totalorder %s26, %s42
      %p44 = scmp.eq.s32.totalorder %s18, 0
      %p45 = por %p43, %p44
      %s47 = sadd.s32 %s46, 1
      %p50 = scmp.eq.s32.totalorder %s12, 3
      %p51 = scmp.ne.s32.totalorder %s46, %s48
      %p52 = scmp.eq.s32.totalorder %s12, 0
      %p53 = por %p51, %p52
      %p54 = scmp.ne.s32.totalorder %s46, %s48
      %p55 = scmp.eq.s32.totalorder %s17, 3
      %p56 = por %p54, %p55
      %p57 = scmp.ne.s32.totalorder %s48, %s49
      %p58 = scmp.eq.s32.totalorder %s17, 0
      %p59 = por %p57, %p58
      %p60 = scmp.ne.s32.totalorder %s48, %s49
      %p61 = scmp.eq.s32.totalorder %s18, 3
      %p62 = por %p60, %p61
      %p64 = scmp.ne.s32.totalorder %s49, %s63
      %p65 = scmp.eq.s32.totalorder %s18, 0
      %p66 = por %p64, %p65
      %s68 = sadd.s32 %s67, 1
      %p71 = scmp.eq.s32.totalorder %s12, 3
      %p72 = scmp.ne.s32.totalorder %s67, %s69
      %p73 = scmp.eq.s32.totalorder %s12, 0
      %p74 = por %p72, %p73
      %p75 = scmp.ne.s32.totalorder %s67, %s69
      %p76 = scmp.eq.s32.totalorder %s17, 3
      %p77 = por %p75, %p76
      %p78 = scmp.ne.s32.totalorder %s69, %s70
      %p79 = scmp.eq.s32.totalorder %s17, 0
      %p80 = por %p78, %p79
      %p81 = scmp.ne.s32.totalorder %s69, %s70
      %p82 = scmp.eq.s32.totalorder %s18, 3
      %p83 = por %p81, %p82
      %p85 = scmp.ne.s32.totalorder %s70, %s84
      %p86 = scmp.eq.s32.totalorder %s18, 0
      %p87 = por %p85, %p86
      %s88 = ssub.s32 %s12, %s19
      %p89 = scmp.eq.s32.totalorder %s88, 0
      %s91 = sadd.s32 %s90, 1
      %s92 = scalar_select %p89, %s90, %s91
      %p95 = pneg %p89
      %p96 = scmp.eq.s32.totalorder %s12, 3
      %p97 = por %p95, %p96
      %p98 = scmp.ne.s32.totalorder %s90, %s93
      %p99 = scmp.eq.s32.totalorder %s12, 0
      %p100 = por %p98, %p99
      %p101 = scmp.ne.s32.totalorder %s90, %s93
      %p102 = scmp.eq.s32.totalorder %s17, 3
      %p103 = por %p101, %p102
      %p104 = scmp.ne.s32.totalorder %s93, %s94
      %p105 = scmp.eq.s32.totalorder %s17, 0
      %p106 = por %p104, %p105
      %p107 = scmp.ne.s32.totalorder %s93, %s94
      %p108 = scmp.eq.s32.totalorder %s18, 3
      %p109 = por %p107, %p108
      %p111 = scmp.ne.s32.totalorder %s94, %s110
      %p112 = scmp.eq.s32.totalorder %s18, 0
      %p113 = por %p111, %p112
      %p114 = scmp.le.s32.totalorder 1, %s12
      %p115 = scmp.lt.s32.totalorder %s12, 5
      %p116 = pnand %p114, %p115
      %p117 = pneg %p116
      // Predicated region
      $region9: #{full_connected_conv3d_pallas.1} parent=5 // pred_check
        _
      $region10: #{full_connected_conv3d_pallas.1} parent=5 // pred_check_branch
        %119 = sbr.rel (%p116) target = $region12
      $region11: #{full_connected_conv3d_pallas.1} parent=5 // pred_region
        %s120 = ssub.s32 %s12, 1
        // Predicated region
        $region13: #{full_connected_conv3d_pallas.1} parent=11 // pred_check
          %p121 = pneg %p59
        $region14: #{full_connected_conv3d_pallas.1} parent=11 // pred_check_branch
          %123 = sbr.rel (%p121) target = $region16
        $region15: #{full_connected_conv3d_pallas.1} parent=11 // pred_region
          _
        $region16: #{full_connected_conv3d_pallas.1} parent=11 // pred_fallthru
          _
        // Predicated region
        $region17: #{full_connected_conv3d_pallas.1} parent=11 // pred_check
          %p124 = pneg %p80
        $region18: #{full_connected_conv3d_pallas.1} parent=11 // pred_check_branch
          %126 = sbr.rel (%p124) target = $region20
        $region19: #{full_connected_conv3d_pallas.1} parent=11 // pred_region
          _
        $region20: #{full_connected_conv3d_pallas.1} parent=11 // pred_fallthru
          _
      $region12: #{full_connected_conv3d_pallas.1} parent=5 // pred_fallthru
        _
      %p127 = scmp.lt.s32.totalorder %s12, 4
      // Predicated region
      $region21: #{full_connected_conv3d_pallas.1} parent=5 // pred_check
        %p128 = pneg %p127
      $region22: #{full_connected_conv3d_pallas.1} parent=5 // pred_check_branch
        %130 = sbr.rel (%p128) target = $region24
      $region23: #{full_connected_conv3d_pallas.1} parent=5 // pred_region
        // Predicated region
        $region25: #{full_connected_conv3d_pallas.1} parent=23 // pred_check
          %p131 = pneg %p32
        $region26: #{full_connected_conv3d_pallas.1} parent=23 // pred_check_branch
          %133 = sbr.rel (%p131) target = $region28
        $region27: #{full_connected_conv3d_pallas.1} parent=23 // pred_region
          %s134 = smul.u32 128, %s12
          %p135 = scmp.lt.s32.totalorder %s134, 511
          %s136 = scalar_select %p135, %s134, 511
          %s137 = smul.addr %s136, 8
          %s138 = scalar_lea.vmem %s0, %s137
          %s139 = smul.u32 128, %s12
        $region28: #{full_connected_conv3d_pallas.1} parent=23 // pred_fallthru
          _
      $region24: #{full_connected_conv3d_pallas.1} parent=5 // pred_fallthru
        _
      %p140 = scmp.le.s32.totalorder 1, %s12
      %p141 = scmp.lt.s32.totalorder %s12, 5
      %p142 = pnand %p140, %p141
      %p143 = pneg %p142
      // Predicated region
      $region29: #{full_connected_conv3d_pallas.1} parent=5 // pred_check
        _
      $region30: #{full_connected_conv3d_pallas.1} parent=5 // pred_check_branch
        %145 = sbr.rel (%p142) target = $region32
      $region31: #{full_connected_conv3d_pallas.1} parent=5 // pred_region
        %s146 = ssub.s32 %s12, 1
        %s147 = smul.u32 128, %s17
        %p148 = scmp.lt.s32.totalorder %s147, 511
        %s149 = scalar_select %p148, %s147, 511
        %s150 = smul.addr %s149, 8
        %s151 = scalar_lea.vmem %s0, %s150
        %p152 = pneg %p38
        %p153 = pneg %p35
        %p154 = pneg %p59
        %p155 = pneg %p56
        %p156 = pneg %p80
        %p157 = pneg %p77
        %p158 = pneg %p106
        %p159 = pneg %p103
        %s160 = sand.u32 %s93, 1
        %s161 = scalar_lea.sflag [#allocation3], %s160
        %s162 = sand.u32 %s93, 1
        %s163 = smul.addr %s162, 1024
        %s164 = scalar_lea.vmem [#allocation2], %s163
        %s165 = smul.u32 128, %s17
        %p166 = scmp.lt.s32.totalorder %s165, 511
        %s167 = scalar_select %p166, %s165, 511
        %s168 = smul.addr %s167, 8
        %s169 = scalar_lea.vmem %s0, %s168
        %s170 = smul.u32 128, %s17
        %s171 = smul.u32 128, %s17
        %v172 = vld [vmem:[%s169] sm:$0xff]
        %v173 = vld [vmem:[%s169 + $0x8] sm:$0xff]
        %v174 = vld [vmem:[%s169 + $0x10] sm:$0xff]
        %v175 = vld [vmem:[%s169 + $0x18] sm:$0xff]
        %v176 = vld [vmem:[%s169 + $0x20] sm:$0xff]
        %v177 = vld [vmem:[%s169 + $0x28] sm:$0xff]
        %v178 = vld [vmem:[%s169 + $0x30] sm:$0xff]
        %v179 = vld [vmem:[%s169 + $0x38] sm:$0xff]
        %v180 = vld [vmem:[%s169 + $0x40] sm:$0xff]
        %v181 = vld [vmem:[%s169 + $0x48] sm:$0xff]
        %v182 = vld [vmem:[%s169 + $0x50] sm:$0xff]
        %v183 = vld [vmem:[%s169 + $0x58] sm:$0xff]
        %v184 = vld [vmem:[%s169 + $0x60] sm:$0xff]
        %v185 = vld [vmem:[%s169 + $0x68] sm:$0xff]
        %v186 = vld [vmem:[%s169 + $0x70] sm:$0xff]
        %v187 = vld [vmem:[%s169 + $0x78] sm:$0xff]
        %v188 = vld [vmem:[%s169 + $0x80] sm:$0xff]
        %v189 = vld [vmem:[%s169 + $0x88] sm:$0xff]
        %v190 = vld [vmem:[%s169 + $0x90] sm:$0xff]
        %v191 = vld [vmem:[%s169 + $0x98] sm:$0xff]
        %v192 = vld [vmem:[%s169 + $0xa0] sm:$0xff]
        %v193 = vld [vmem:[%s169 + $0xa8] sm:$0xff]
        %v194 = vld [vmem:[%s169 + $0xb0] sm:$0xff]
        %v195 = vld [vmem:[%s169 + $0xb8] sm:$0xff]
        %v196 = vld [vmem:[%s169 + $0xc0] sm:$0xff]
        %v197 = vld [vmem:[%s169 + $0xc8] sm:$0xff]
        %v198 = vld [vmem:[%s169 + $0xd0] sm:$0xff]
        %v199 = vld [vmem:[%s169 + $0xd8] sm:$0xff]
        %v200 = vld [vmem:[%s169 + $0xe0] sm:$0xff]
        %v201 = vld [vmem:[%s169 + $0xe8] sm:$0xff]
        %v202 = vld [vmem:[%s169 + $0xf0] sm:$0xff]
        %v203 = vld [vmem:[%s169 + $0xf8] sm:$0xff]
        %v204 = vld [vmem:[%s169 + $0x100] sm:$0xff]
        %v205 = vld [vmem:[%s169 + $0x108] sm:$0xff]
        %v206 = vld [vmem:[%s169 + $0x110] sm:$0xff]
        %v207 = vld [vmem:[%s169 + $0x118] sm:$0xff]
        %v208 = vld [vmem:[%s169 + $0x120] sm:$0xff]
        %v209 = vld [vmem:[%s169 + $0x128] sm:$0xff]
        %v210 = vld [vmem:[%s169 + $0x130] sm:$0xff]
        %v211 = vld [vmem:[%s169 + $0x138] sm:$0xff]
        %v212 = vld [vmem:[%s169 + $0x140] sm:$0xff]
        %v213 = vld [vmem:[%s169 + $0x148] sm:$0xff]
        %v214 = vld [vmem:[%s169 + $0x150] sm:$0xff]
        %v215 = vld [vmem:[%s169 + $0x158] sm:$0xff]
        %v216 = vld [vmem:[%s169 + $0x160] sm:$0xff]
        %v217 = vld [vmem:[%s169 + $0x168] sm:$0xff]
        %v218 = vld [vmem:[%s169 + $0x170] sm:$0xff]
        %v219 = vld [vmem:[%s169 + $0x178] sm:$0xff]
        %v220 = vld [vmem:[%s169 + $0x180] sm:$0xff]
        %v221 = vld [vmem:[%s169 + $0x188] sm:$0xff]
        %v222 = vld [vmem:[%s169 + $0x190] sm:$0xff]
        %v223 = vld [vmem:[%s169 + $0x198] sm:$0xff]
        %v224 = vld [vmem:[%s169 + $0x1a0] sm:$0xff]
        %v225 = vld [vmem:[%s169 + $0x1a8] sm:$0xff]
        %v226 = vld [vmem:[%s169 + $0x1b0] sm:$0xff]
        %v227 = vld [vmem:[%s169 + $0x1b8] sm:$0xff]
        %v228 = vld [vmem:[%s169 + $0x1c0] sm:$0xff]
        %v229 = vld [vmem:[%s169 + $0x1c8] sm:$0xff]
        %v230 = vld [vmem:[%s169 + $0x1d0] sm:$0xff]
        %v231 = vld [vmem:[%s169 + $0x1d8] sm:$0xff]
        %v232 = vld [vmem:[%s169 + $0x1e0] sm:$0xff]
        %v233 = vld [vmem:[%s169 + $0x1e8] sm:$0xff]
        %v234 = vld [vmem:[%s169 + $0x1f0] sm:$0xff]
        %v235 = vld [vmem:[%s169 + $0x1f8] sm:$0xff]
        %v236 = vld [vmem:[%s169 + $0x200] sm:$0xff]
        %v237 = vld [vmem:[%s169 + $0x208] sm:$0xff]
        %v238 = vld [vmem:[%s169 + $0x210] sm:$0xff]
        %v239 = vld [vmem:[%s169 + $0x218] sm:$0xff]
        %v240 = vld [vmem:[%s169 + $0x220] sm:$0xff]
        %v241 = vld [vmem:[%s169 + $0x228] sm:$0xff]
        %v242 = vld [vmem:[%s169 + $0x230] sm:$0xff]
        %v243 = vld [vmem:[%s169 + $0x238] sm:$0xff]
        %v244 = vld [vmem:[%s169 + $0x240] sm:$0xff]
        %v245 = vld [vmem:[%s169 + $0x248] sm:$0xff]
        %v246 = vld [vmem:[%s169 + $0x250] sm:$0xff]
        %v247 = vld [vmem:[%s169 + $0x258] sm:$0xff]
        %v248 = vld [vmem:[%s169 + $0x260] sm:$0xff]
        %v249 = vld [vmem:[%s169 + $0x268] sm:$0xff]
        %v250 = vld [vmem:[%s169 + $0x270] sm:$0xff]
        %v251 = vld [vmem:[%s169 + $0x278] sm:$0xff]
        %v252 = vld [vmem:[%s169 + $0x280] sm:$0xff]
        %v253 = vld [vmem:[%s169 + $0x288] sm:$0xff]
        %v254 = vld [vmem:[%s169 + $0x290] sm:$0xff]
        %v255 = vld [vmem:[%s169 + $0x298] sm:$0xff]
        %v256 = vld [vmem:[%s169 + $0x2a0] sm:$0xff]
        %v257 = vld [vmem:[%s169 + $0x2a8] sm:$0xff]
        %v258 = vld [vmem:[%s169 + $0x2b0] sm:$0xff]
        %v259 = vld [vmem:[%s169 + $0x2b8] sm:$0xff]
        %v260 = vld [vmem:[%s169 + $0x2c0] sm:$0xff]
        %v261 = vld [vmem:[%s169 + $0x2c8] sm:$0xff]
        %v262 = vld [vmem:[%s169 + $0x2d0] sm:$0xff]
        %v263 = vld [vmem:[%s169 + $0x2d8] sm:$0xff]
        %v264 = vld [vmem:[%s169 + $0x2e0] sm:$0xff]
        %v265 = vld [vmem:[%s169 + $0x2e8] sm:$0xff]
        %v266 = vld [vmem:[%s169 + $0x2f0] sm:$0xff]
        %v267 = vld [vmem:[%s169 + $0x2f8] sm:$0xff]
        %v268 = vld [vmem:[%s169 + $0x300] sm:$0xff]
        %v269 = vld [vmem:[%s169 + $0x308] sm:$0xff]
        %v270 = vld [vmem:[%s169 + $0x310] sm:$0xff]
        %v271 = vld [vmem:[%s169 + $0x318] sm:$0xff]
        %v272 = vld [vmem:[%s169 + $0x320] sm:$0xff]
        %v273 = vld [vmem:[%s169 + $0x328] sm:$0xff]
        %v274 = vld [vmem:[%s169 + $0x330] sm:$0xff]
        %v275 = vld [vmem:[%s169 + $0x338] sm:$0xff]
        %v276 = vld [vmem:[%s169 + $0x340] sm:$0xff]
        %v277 = vld [vmem:[%s169 + $0x348] sm:$0xff]
        %v278 = vld [vmem:[%s169 + $0x350] sm:$0xff]
        %v279 = vld [vmem:[%s169 + $0x358] sm:$0xff]
        %v280 = vld [vmem:[%s169 + $0x360] sm:$0xff]
        %v281 = vld [vmem:[%s169 + $0x368] sm:$0xff]
        %v282 = vld [vmem:[%s169 + $0x370] sm:$0xff]
        %v283 = vld [vmem:[%s169 + $0x378] sm:$0xff]
        %v284 = vld [vmem:[%s169 + $0x380] sm:$0xff]
        %v285 = vld [vmem:[%s169 + $0x388] sm:$0xff]
        %v286 = vld [vmem:[%s169 + $0x390] sm:$0xff]
        %v287 = vld [vmem:[%s169 + $0x398] sm:$0xff]
        %v288 = vld [vmem:[%s169 + $0x3a0] sm:$0xff]
        %v289 = vld [vmem:[%s169 + $0x3a8] sm:$0xff]
        %v290 = vld [vmem:[%s169 + $0x3b0] sm:$0xff]
        %v291 = vld [vmem:[%s169 + $0x3b8] sm:$0xff]
        %v292 = vld [vmem:[%s169 + $0x3c0] sm:$0xff]
        %v293 = vld [vmem:[%s169 + $0x3c8] sm:$0xff]
        %v294 = vld [vmem:[%s169 + $0x3d0] sm:$0xff]
        %v295 = vld [vmem:[%s169 + $0x3d8] sm:$0xff]
        %v296 = vld [vmem:[%s169 + $0x3e0] sm:$0xff]
        %v297 = vld [vmem:[%s169 + $0x3e8] sm:$0xff]
        %v298 = vld [vmem:[%s169 + $0x3f0] sm:$0xff]
        %v299 = vld [vmem:[%s169 + $0x3f8] sm:$0xff]
        %v300 = vld [vmem:[%s1] sm:$0xff]
        %v301 = vld [vmem:[%s1 + $0x8] sm:$0xff]
        %v302 = vld [vmem:[%s1 + $0x10] sm:$0xff]
        %v303 = vld [vmem:[%s1 + $0x18] sm:$0xff]
        %v304 = vld [vmem:[%s1 + $0x20] sm:$0xff]
        %v305 = vld [vmem:[%s1 + $0x28] sm:$0xff]
        %v306 = vld [vmem:[%s1 + $0x30] sm:$0xff]
        %v307 = vld [vmem:[%s1 + $0x38] sm:$0xff]
        %v308 = vld [vmem:[%s1 + $0x40] sm:$0xff]
        %v309 = vld [vmem:[%s1 + $0x48] sm:$0xff]
        %v310 = vld [vmem:[%s1 + $0x50] sm:$0xff]
        %v311 = vld [vmem:[%s1 + $0x58] sm:$0xff]
        %v312 = vld [vmem:[%s1 + $0x60] sm:$0xff]
        %v313 = vld [vmem:[%s1 + $0x68] sm:$0xff]
        %v314 = vld [vmem:[%s1 + $0x70] sm:$0xff]
        %v315 = vld [vmem:[%s1 + $0x78] sm:$0xff]
        %v316 = vld [vmem:[%s2] sm:$0x1]
        %v318 = vperm.slane %v316, 0
        %320 = vmatpush.msra.mxu0 %v315
        %321 = vmatpush.msra.mxu0 %v314
        %322 = vmatpush.msra.mxu0 %v313
        %323 = vmatpush.msra.mxu0 %v312
        %324 = vmatpush.msra.mxu0 %v311
        %325 = vmatpush.msra.mxu0 %v310
        %326 = vmatpush.msra.mxu0 %v309
        %327 = vmatpush.msra.mxu0 %v308
        %328 = vmatpush.msra.mxu0 %v307
        %329 = vmatpush.msra.mxu0 %v306
        %330 = vmatpush.msra.mxu0 %v305
        %331 = vmatpush.msra.mxu0 %v304
        %332 = vmatpush.msra.mxu0 %v303
        %333 = vmatpush.msra.mxu0 %v302
        %334 = vmatpush.msra.mxu0 %v301
        %335 = vmatpush.msra.mxu0 %v300
        %336 = vmatmul.f32.gmra.mxu0 %v172
        %v337 = vpop.f32.mrf.mxu0
        %v338 = vadd.f32 %v318, %v337
        %339 = vmatmul.f32.gmra.mxu0 %v173
        %v340 = vpop.f32.mrf.mxu0
        %v341 = vadd.f32 %v318, %v340
        %342 = vmatmul.f32.gmra.mxu0 %v174
        %v343 = vpop.f32.mrf.mxu0
        %v344 = vadd.f32 %v318, %v343
        %345 = vmatmul.f32.gmra.mxu0 %v175
        %v346 = vpop.f32.mrf.mxu0
        %v347 = vadd.f32 %v318, %v346
        %348 = vmatmul.f32.gmra.mxu0 %v176
        %v349 = vpop.f32.mrf.mxu0
        %v350 = vadd.f32 %v318, %v349
        %351 = vmatmul.f32.gmra.mxu0 %v177
        %v352 = vpop.f32.mrf.mxu0
        %v353 = vadd.f32 %v318, %v352
        %354 = vmatmul.f32.gmra.mxu0 %v178
        %v355 = vpop.f32.mrf.mxu0
        %v356 = vadd.f32 %v318, %v355
        %357 = vmatmul.f32.gmra.mxu0 %v179
        %v358 = vpop.f32.mrf.mxu0
        %v359 = vadd.f32 %v318, %v358
        %360 = vmatmul.f32.gmra.mxu0 %v180
        %v361 = vpop.f32.mrf.mxu0
        %v362 = vadd.f32 %v318, %v361
        %363 = vmatmul.f32.gmra.mxu0 %v181
        %v364 = vpop.f32.mrf.mxu0
        %v365 = vadd.f32 %v318, %v364
        %366 = vmatmul.f32.gmra.mxu0 %v182
        %v367 = vpop.f32.mrf.mxu0
        %v368 = vadd.f32 %v318, %v367
        %369 = vmatmul.f32.gmra.mxu0 %v183
        %v370 = vpop.f32.mrf.mxu0
        %v371 = vadd.f32 %v318, %v370
        %372 = vmatmul.f32.gmra.mxu0 %v184
        %v373 = vpop.f32.mrf.mxu0
        %v374 = vadd.f32 %v318, %v373
        %375 = vmatmul.f32.gmra.mxu0 %v185
        %v376 = vpop.f32.mrf.mxu0
        %v377 = vadd.f32 %v318, %v376
        %378 = vmatmul.f32.gmra.mxu0 %v186
        %v379 = vpop.f32.mrf.mxu0
        %v380 = vadd.f32 %v318, %v379
        %381 = vmatmul.f32.gmra.mxu0 %v187
        %v382 = vpop.f32.mrf.mxu0
        %v383 = vadd.f32 %v318, %v382
        %384 = vmatmul.f32.gmra.mxu0 %v188
        %v385 = vpop.f32.mrf.mxu0
        %v386 = vadd.f32 %v318, %v385
        %387 = vmatmul.f32.gmra.mxu0 %v189
        %v388 = vpop.f32.mrf.mxu0
        %v389 = vadd.f32 %v318, %v388
        %390 = vmatmul.f32.gmra.mxu0 %v190
        %v391 = vpop.f32.mrf.mxu0
        %v392 = vadd.f32 %v318, %v391
        %393 = vmatmul.f32.gmra.mxu0 %v191
        %v394 = vpop.f32.mrf.mxu0
        %v395 = vadd.f32 %v318, %v394
        %396 = vmatmul.f32.gmra.mxu0 %v192
        %v397 = vpop.f32.mrf.mxu0
        %v398 = vadd.f32 %v318, %v397
        %399 = vmatmul.f32.gmra.mxu0 %v193
        %v400 = vpop.f32.mrf.mxu0
        %v401 = vadd.f32 %v318, %v400
        %402 = vmatmul.f32.gmra.mxu0 %v194
        %v403 = vpop.f32.mrf.mxu0
        %v404 = vadd.f32 %v318, %v403
        %405 = vmatmul.f32.gmra.mxu0 %v195
        %v406 = vpop.f32.mrf.mxu0
        %v407 = vadd.f32 %v318, %v406
        %408 = vmatmul.f32.gmra.mxu0 %v196
        %v409 = vpop.f32.mrf.mxu0
        %v410 = vadd.f32 %v318, %v409
        %411 = vmatmul.f32.gmra.mxu0 %v197
        %v412 = vpop.f32.mrf.mxu0
        %v413 = vadd.f32 %v318, %v412
        %414 = vmatmul.f32.gmra.mxu0 %v198
        %v415 = vpop.f32.mrf.mxu0
        %v416 = vadd.f32 %v318, %v415
        %417 = vmatmul.f32.gmra.mxu0 %v199
        %v418 = vpop.f32.mrf.mxu0
        %v419 = vadd.f32 %v318, %v418
        %420 = vmatmul.f32.gmra.mxu0 %v200
        %v421 = vpop.f32.mrf.mxu0
        %v422 = vadd.f32 %v318, %v421
        %423 = vmatmul.f32.gmra.mxu0 %v201
        %v424 = vpop.f32.mrf.mxu0
        %v425 = vadd.f32 %v318, %v424
        %426 = vmatmul.f32.gmra.mxu0 %v202
        %v427 = vpop.f32.mrf.mxu0
        %v428 = vadd.f32 %v318, %v427
        %429 = vmatmul.f32.gmra.mxu0 %v203
        %v430 = vpop.f32.mrf.mxu0
        %v431 = vadd.f32 %v318, %v430
        %432 = vmatmul.f32.gmra.mxu0 %v204
        %v433 = vpop.f32.mrf.mxu0
        %v434 = vadd.f32 %v318, %v433
        %435 = vmatmul.f32.gmra.mxu0 %v205
        %v436 = vpop.f32.mrf.mxu0
        %v437 = vadd.f32 %v318, %v436
        %438 = vmatmul.f32.gmra.mxu0 %v206
        %v439 = vpop.f32.mrf.mxu0
        %v440 = vadd.f32 %v318, %v439
        %441 = vmatmul.f32.gmra.mxu0 %v207
        %v442 = vpop.f32.mrf.mxu0
        %v443 = vadd.f32 %v318, %v442
        %444 = vmatmul.f32.gmra.mxu0 %v208
        %v445 = vpop.f32.mrf.mxu0
        %v446 = vadd.f32 %v318, %v445
        %447 = vmatmul.f32.gmra.mxu0 %v209
        %v448 = vpop.f32.mrf.mxu0
        %v449 = vadd.f32 %v318, %v448
        %450 = vmatmul.f32.gmra.mxu0 %v210
        %v451 = vpop.f32.mrf.mxu0
        %v452 = vadd.f32 %v318, %v451
        %453 = vmatmul.f32.gmra.mxu0 %v211
        %v454 = vpop.f32.mrf.mxu0
        %v455 = vadd.f32 %v318, %v454
        %456 = vmatmul.f32.gmra.mxu0 %v212
        %v457 = vpop.f32.mrf.mxu0
        %v458 = vadd.f32 %v318, %v457
        %459 = vmatmul.f32.gmra.mxu0 %v213
        %v460 = vpop.f32.mrf.mxu0
        %v461 = vadd.f32 %v318, %v460
        %462 = vmatmul.f32.gmra.mxu0 %v214
        %v463 = vpop.f32.mrf.mxu0
        %v464 = vadd.f32 %v318, %v463
        %465 = vmatmul.f32.gmra.mxu0 %v215
        %v466 = vpop.f32.mrf.mxu0
        %v467 = vadd.f32 %v318, %v466
        %468 = vmatmul.f32.gmra.mxu0 %v216
        %v469 = vpop.f32.mrf.mxu0
        %v470 = vadd.f32 %v318, %v469
        %471 = vmatmul.f32.gmra.mxu0 %v217
        %v472 = vpop.f32.mrf.mxu0
        %v473 = vadd.f32 %v318, %v472
        %474 = vmatmul.f32.gmra.mxu0 %v218
        %v475 = vpop.f32.mrf.mxu0
        %v476 = vadd.f32 %v318, %v475
        %477 = vmatmul.f32.gmra.mxu0 %v219
        %v478 = vpop.f32.mrf.mxu0
        %v479 = vadd.f32 %v318, %v478
        %480 = vmatmul.f32.gmra.mxu0 %v220
        %v481 = vpop.f32.mrf.mxu0
        %v482 = vadd.f32 %v318, %v481
        %483 = vmatmul.f32.gmra.mxu0 %v221
        %v484 = vpop.f32.mrf.mxu0
        %v485 = vadd.f32 %v318, %v484
        %486 = vmatmul.f32.gmra.mxu0 %v222
        %v487 = vpop.f32.mrf.mxu0
        %v488 = vadd.f32 %v318, %v487
        %489 = vmatmul.f32.gmra.mxu0 %v223
        %v490 = vpop.f32.mrf.mxu0
        %v491 = vadd.f32 %v318, %v490
        %492 = vmatmul.f32.gmra.mxu0 %v224
        %v493 = vpop.f32.mrf.mxu0
        %v494 = vadd.f32 %v318, %v493
        %495 = vmatmul.f32.gmra.mxu0 %v225
        %v496 = vpop.f32.mrf.mxu0
        %v497 = vadd.f32 %v318, %v496
        %498 = vmatmul.f32.gmra.mxu0 %v226
        %v499 = vpop.f32.mrf.mxu0
        %v500 = vadd.f32 %v318, %v499
        %501 = vmatmul.f32.gmra.mxu0 %v227
        %v502 = vpop.f32.mrf.mxu0
        %v503 = vadd.f32 %v318, %v502
        %504 = vmatmul.f32.gmra.mxu0 %v228
        %v505 = vpop.f32.mrf.mxu0
        %v506 = vadd.f32 %v318, %v505
        %507 = vmatmul.f32.gmra.mxu0 %v229
        %v508 = vpop.f32.mrf.mxu0
        %v509 = vadd.f32 %v318, %v508
        %510 = vmatmul.f32.gmra.mxu0 %v230
        %v511 = vpop.f32.mrf.mxu0
        %v512 = vadd.f32 %v318, %v511
        %513 = vmatmul.f32.gmra.mxu0 %v231
        %v514 = vpop.f32.mrf.mxu0
        %v515 = vadd.f32 %v318, %v514
        %516 = vmatmul.f32.gmra.mxu0 %v232
        %v517 = vpop.f32.mrf.mxu0
        %v518 = vadd.f32 %v318, %v517
        %519 = vmatmul.f32.gmra.mxu0 %v233
        %v520 = vpop.f32.mrf.mxu0
        %v521 = vadd.f32 %v318, %v520
        %522 = vmatmul.f32.gmra.mxu0 %v234
        %v523 = vpop.f32.mrf.mxu0
        %v524 = vadd.f32 %v318, %v523
        %525 = vmatmul.f32.gmra.mxu0 %v235
        %v526 = vpop.f32.mrf.mxu0
        %v527 = vadd.f32 %v318, %v526
        %528 = vmatmul.f32.gmra.mxu0 %v236
        %v529 = vpop.f32.mrf.mxu0
        %v530 = vadd.f32 %v318, %v529
        %531 = vmatmul.f32.gmra.mxu0 %v237
        %v532 = vpop.f32.mrf.mxu0
        %v533 = vadd.f32 %v318, %v532
        %534 = vmatmul.f32.gmra.mxu0 %v238
        %v535 = vpop.f32.mrf.mxu0
        %v536 = vadd.f32 %v318, %v535
        %537 = vmatmul.f32.gmra.mxu0 %v239
        %v538 = vpop.f32.mrf.mxu0
        %v539 = vadd.f32 %v318, %v538
        %540 = vmatmul.f32.gmra.mxu0 %v240
        %v541 = vpop.f32.mrf.mxu0
        %v542 = vadd.f32 %v318, %v541
        %543 = vmatmul.f32.gmra.mxu0 %v241
        %v544 = vpop.f32.mrf.mxu0
        %v545 = vadd.f32 %v318, %v544
        %546 = vmatmul.f32.gmra.mxu0 %v242
        %v547 = vpop.f32.mrf.mxu0
        %v548 = vadd.f32 %v318, %v547
        %549 = vmatmul.f32.gmra.mxu0 %v243
        %v550 = vpop.f32.mrf.mxu0
        %v551 = vadd.f32 %v318, %v550
        %552 = vmatmul.f32.gmra.mxu0 %v244
        %v553 = vpop.f32.mrf.mxu0
        %v554 = vadd.f32 %v318, %v553
        %555 = vmatmul.f32.gmra.mxu0 %v245
        %v556 = vpop.f32.mrf.mxu0
        %v557 = vadd.f32 %v318, %v556
        %558 = vmatmul.f32.gmra.mxu0 %v246
        %v559 = vpop.f32.mrf.mxu0
        %v560 = vadd.f32 %v318, %v559
        %561 = vmatmul.f32.gmra.mxu0 %v247
        %v562 = vpop.f32.mrf.mxu0
        %v563 = vadd.f32 %v318, %v562
        %564 = vmatmul.f32.gmra.mxu0 %v248
        %v565 = vpop.f32.mrf.mxu0
        %v566 = vadd.f32 %v318, %v565
        %567 = vmatmul.f32.gmra.mxu0 %v249
        %v568 = vpop.f32.mrf.mxu0
        %v569 = vadd.f32 %v318, %v568
        %570 = vmatmul.f32.gmra.mxu0 %v250
        %v571 = vpop.f32.mrf.mxu0
        %v572 = vadd.f32 %v318, %v571
        %573 = vmatmul.f32.gmra.mxu0 %v251
        %v574 = vpop.f32.mrf.mxu0
        %v575 = vadd.f32 %v318, %v574
        %576 = vmatmul.f32.gmra.mxu0 %v252
        %v577 = vpop.f32.mrf.mxu0
        %v578 = vadd.f32 %v318, %v577
        %579 = vmatmul.f32.gmra.mxu0 %v253
        %v580 = vpop.f32.mrf.mxu0
        %v581 = vadd.f32 %v318, %v580
        %582 = vmatmul.f32.gmra.mxu0 %v254
        %v583 = vpop.f32.mrf.mxu0
        %v584 = vadd.f32 %v318, %v583
        %585 = vmatmul.f32.gmra.mxu0 %v255
        %v586 = vpop.f32.mrf.mxu0
        %v587 = vadd.f32 %v318, %v586
        %588 = vmatmul.f32.gmra.mxu0 %v256
        %v589 = vpop.f32.mrf.mxu0
        %v590 = vadd.f32 %v318, %v589
        %591 = vmatmul.f32.gmra.mxu0 %v257
        %v592 = vpop.f32.mrf.mxu0
        %v593 = vadd.f32 %v318, %v592
        %594 = vmatmul.f32.gmra.mxu0 %v258
        %v595 = vpop.f32.mrf.mxu0
        %v596 = vadd.f32 %v318, %v595
        %597 = vmatmul.f32.gmra.mxu0 %v259
        %v598 = vpop.f32.mrf.mxu0
        %v599 = vadd.f32 %v318, %v598
        %600 = vmatmul.f32.gmra.mxu0 %v260
        %v601 = vpop.f32.mrf.mxu0
        %v602 = vadd.f32 %v318, %v601
        %603 = vmatmul.f32.gmra.mxu0 %v261
        %v604 = vpop.f32.mrf.mxu0
        %v605 = vadd.f32 %v318, %v604
        %606 = vmatmul.f32.gmra.mxu0 %v262
        %v607 = vpop.f32.mrf.mxu0
        %v608 = vadd.f32 %v318, %v607
        %609 = vmatmul.f32.gmra.mxu0 %v263
        %v610 = vpop.f32.mrf.mxu0
        %v611 = vadd.f32 %v318, %v610
        %612 = vmatmul.f32.gmra.mxu0 %v264
        %v613 = vpop.f32.mrf.mxu0
        %v614 = vadd.f32 %v318, %v613
        %615 = vmatmul.f32.gmra.mxu0 %v265
        %v616 = vpop.f32.mrf.mxu0
        %v617 = vadd.f32 %v318, %v616
        %618 = vmatmul.f32.gmra.mxu0 %v266
        %v619 = vpop.f32.mrf.mxu0
        %v620 = vadd.f32 %v318, %v619
        %621 = vmatmul.f32.gmra.mxu0 %v267
        %v622 = vpop.f32.mrf.mxu0
        %v623 = vadd.f32 %v318, %v622
        %624 = vmatmul.f32.gmra.mxu0 %v268
        %v625 = vpop.f32.mrf.mxu0
        %v626 = vadd.f32 %v318, %v625
        %627 = vmatmul.f32.gmra.mxu0 %v269
        %v628 = vpop.f32.mrf.mxu0
        %v629 = vadd.f32 %v318, %v628
        %630 = vmatmul.f32.gmra.mxu0 %v270
        %v631 = vpop.f32.mrf.mxu0
        %v632 = vadd.f32 %v318, %v631
        %633 = vmatmul.f32.gmra.mxu0 %v271
        %v634 = vpop.f32.mrf.mxu0
        %v635 = vadd.f32 %v318, %v634
        %636 = vmatmul.f32.gmra.mxu0 %v272
        %v637 = vpop.f32.mrf.mxu0
        %v638 = vadd.f32 %v318, %v637
        %639 = vmatmul.f32.gmra.mxu0 %v273
        %v640 = vpop.f32.mrf.mxu0
        %v641 = vadd.f32 %v318, %v640
        %642 = vmatmul.f32.gmra.mxu0 %v274
        %v643 = vpop.f32.mrf.mxu0
        %v644 = vadd.f32 %v318, %v643
        %645 = vmatmul.f32.gmra.mxu0 %v275
        %v646 = vpop.f32.mrf.mxu0
        %v647 = vadd.f32 %v318, %v646
        %648 = vmatmul.f32.gmra.mxu0 %v276
        %v649 = vpop.f32.mrf.mxu0
        %v650 = vadd.f32 %v318, %v649
        %651 = vmatmul.f32.gmra.mxu0 %v277
        %v652 = vpop.f32.mrf.mxu0
        %v653 = vadd.f32 %v318, %v652
        %654 = vmatmul.f32.gmra.mxu0 %v278
        %v655 = vpop.f32.mrf.mxu0
        %v656 = vadd.f32 %v318, %v655
        %657 = vmatmul.f32.gmra.mxu0 %v279
        %v658 = vpop.f32.mrf.mxu0
        %v659 = vadd.f32 %v318, %v658
        %660 = vmatmul.f32.gmra.mxu0 %v280
        %v661 = vpop.f32.mrf.mxu0
        %v662 = vadd.f32 %v318, %v661
        %663 = vmatmul.f32.gmra.mxu0 %v281
        %v664 = vpop.f32.mrf.mxu0
        %v665 = vadd.f32 %v318, %v664
        %666 = vmatmul.f32.gmra.mxu0 %v282
        %v667 = vpop.f32.mrf.mxu0
        %v668 = vadd.f32 %v318, %v667
        %669 = vmatmul.f32.gmra.mxu0 %v283
        %v670 = vpop.f32.mrf.mxu0
        %v671 = vadd.f32 %v318, %v670
        %672 = vmatmul.f32.gmra.mxu0 %v284
        %v673 = vpop.f32.mrf.mxu0
        %v674 = vadd.f32 %v318, %v673
        %675 = vmatmul.f32.gmra.mxu0 %v285
        %v676 = vpop.f32.mrf.mxu0
        %v677 = vadd.f32 %v318, %v676
        %678 = vmatmul.f32.gmra.mxu0 %v286
        %v679 = vpop.f32.mrf.mxu0
        %v680 = vadd.f32 %v318, %v679
        %681 = vmatmul.f32.gmra.mxu0 %v287
        %v682 = vpop.f32.mrf.mxu0
        %v683 = vadd.f32 %v318, %v682
        %684 = vmatmul.f32.gmra.mxu0 %v288
        %v685 = vpop.f32.mrf.mxu0
        %v686 = vadd.f32 %v318, %v685
        %687 = vmatmul.f32.gmra.mxu0 %v289
        %v688 = vpop.f32.mrf.mxu0
        %v689 = vadd.f32 %v318, %v688
        %690 = vmatmul.f32.gmra.mxu0 %v290
        %v691 = vpop.f32.mrf.mxu0
        %v692 = vadd.f32 %v318, %v691
        %693 = vmatmul.f32.gmra.mxu0 %v291
        %v694 = vpop.f32.mrf.mxu0
        %v695 = vadd.f32 %v318, %v694
        %696 = vmatmul.f32.gmra.mxu0 %v292
        %v697 = vpop.f32.mrf.mxu0
        %v698 = vadd.f32 %v318, %v697
        %699 = vmatmul.f32.gmra.mxu0 %v293
        %v700 = vpop.f32.mrf.mxu0
        %v701 = vadd.f32 %v318, %v700
        %702 = vmatmul.f32.gmra.mxu0 %v294
        %v703 = vpop.f32.mrf.mxu0
        %v704 = vadd.f32 %v318, %v703
        %705 = vmatmul.f32.gmra.mxu0 %v295
        %v706 = vpop.f32.mrf.mxu0
        %v707 = vadd.f32 %v318, %v706
        %708 = vmatmul.f32.gmra.mxu0 %v296
        %v709 = vpop.f32.mrf.mxu0
        %v710 = vadd.f32 %v318, %v709
        %711 = vmatmul.f32.gmra.mxu0 %v297
        %v712 = vpop.f32.mrf.mxu0
        %v713 = vadd.f32 %v318, %v712
        %714 = vmatmul.f32.gmra.mxu0 %v298
        %v715 = vpop.f32.mrf.mxu0
        %v716 = vadd.f32 %v318, %v715
        %717 = vmatmul.f32.gmra.mxu0 %v299
        %v718 = vpop.f32.mrf.mxu0
        %v719 = vadd.f32 %v318, %v718
        %720 = vdwg.mxu0
        %v721 = vmax.f32 %v338, 0.0
        %v722 = vmax.f32 %v341, 0.0
        %v723 = vmax.f32 %v344, 0.0
        %v724 = vmax.f32 %v347, 0.0
        %v725 = vmax.f32 %v350, 0.0
        %v726 = vmax.f32 %v353, 0.0
        %v727 = vmax.f32 %v356, 0.0
        %v728 = vmax.f32 %v359, 0.0
        %v729 = vmax.f32 %v362, 0.0
        %v730 = vmax.f32 %v365, 0.0
        %v731 = vmax.f32 %v368, 0.0
        %v732 = vmax.f32 %v371, 0.0
        %v733 = vmax.f32 %v374, 0.0
        %v734 = vmax.f32 %v377, 0.0
        %v735 = vmax.f32 %v380, 0.0
        %v736 = vmax.f32 %v383, 0.0
        %v737 = vmax.f32 %v386, 0.0
        %v738 = vmax.f32 %v389, 0.0
        %v739 = vmax.f32 %v392, 0.0
        %v740 = vmax.f32 %v395, 0.0
        %v741 = vmax.f32 %v398, 0.0
        %v742 = vmax.f32 %v401, 0.0
        %v743 = vmax.f32 %v404, 0.0
        %v744 = vmax.f32 %v407, 0.0
        %v745 = vmax.f32 %v410, 0.0
        %v746 = vmax.f32 %v413, 0.0
        %v747 = vmax.f32 %v416, 0.0
        %v748 = vmax.f32 %v419, 0.0
        %v749 = vmax.f32 %v422, 0.0
        %v750 = vmax.f32 %v425, 0.0
        %v751 = vmax.f32 %v428, 0.0
        %v752 = vmax.f32 %v431, 0.0
        %v753 = vmax.f32 %v434, 0.0
        %v754 = vmax.f32 %v437, 0.0
        %v755 = vmax.f32 %v440, 0.0
        %v756 = vmax.f32 %v443, 0.0
        %v757 = vmax.f32 %v446, 0.0
        %v758 = vmax.f32 %v449, 0.0
        %v759 = vmax.f32 %v452, 0.0
        %v760 = vmax.f32 %v455, 0.0
        %v761 = vmax.f32 %v458, 0.0
        %v762 = vmax.f32 %v461, 0.0
        %v763 = vmax.f32 %v464, 0.0
        %v764 = vmax.f32 %v467, 0.0
        %v765 = vmax.f32 %v470, 0.0
        %v766 = vmax.f32 %v473, 0.0
        %v767 = vmax.f32 %v476, 0.0
        %v768 = vmax.f32 %v479, 0.0
        %v769 = vmax.f32 %v482, 0.0
        %v770 = vmax.f32 %v485, 0.0
        %v771 = vmax.f32 %v488, 0.0
        %v772 = vmax.f32 %v491, 0.0
        %v773 = vmax.f32 %v494, 0.0
        %v774 = vmax.f32 %v497, 0.0
        %v775 = vmax.f32 %v500, 0.0
        %v776 = vmax.f32 %v503, 0.0
        %v777 = vmax.f32 %v506, 0.0
        %v778 = vmax.f32 %v509, 0.0
        %v779 = vmax.f32 %v512, 0.0
        %v780 = vmax.f32 %v515, 0.0
        %v781 = vmax.f32 %v518, 0.0
        %v782 = vmax.f32 %v521, 0.0
        %v783 = vmax.f32 %v524, 0.0
        %v784 = vmax.f32 %v527, 0.0
        %v785 = vmax.f32 %v530, 0.0
        %v786 = vmax.f32 %v533, 0.0
        %v787 = vmax.f32 %v536, 0.0
        %v788 = vmax.f32 %v539, 0.0
        %v789 = vmax.f32 %v542, 0.0
        %v790 = vmax.f32 %v545, 0.0
        %v791 = vmax.f32 %v548, 0.0
        %v792 = vmax.f32 %v551, 0.0
        %v793 = vmax.f32 %v554, 0.0
        %v794 = vmax.f32 %v557, 0.0
        %v795 = vmax.f32 %v560, 0.0
        %v796 = vmax.f32 %v563, 0.0
        %v797 = vmax.f32 %v566, 0.0
        %v798 = vmax.f32 %v569, 0.0
        %v799 = vmax.f32 %v572, 0.0
        %v800 = vmax.f32 %v575, 0.0
        %v801 = vmax.f32 %v578, 0.0
        %v802 = vmax.f32 %v581, 0.0
        %v803 = vmax.f32 %v584, 0.0
        %v804 = vmax.f32 %v587, 0.0
        %v805 = vmax.f32 %v590, 0.0
        %v806 = vmax.f32 %v593, 0.0
        %v807 = vmax.f32 %v596, 0.0
        %v808 = vmax.f32 %v599, 0.0
        %v809 = vmax.f32 %v602, 0.0
        %v810 = vmax.f32 %v605, 0.0
        %v811 = vmax.f32 %v608, 0.0
        %v812 = vmax.f32 %v611, 0.0
        %v813 = vmax.f32 %v614, 0.0
        %v814 = vmax.f32 %v617, 0.0
        %v815 = vmax.f32 %v620, 0.0
        %v816 = vmax.f32 %v623, 0.0
        %v817 = vmax.f32 %v626, 0.0
        %v818 = vmax.f32 %v629, 0.0
        %v819 = vmax.f32 %v632, 0.0
        %v820 = vmax.f32 %v635, 0.0
        %v821 = vmax.f32 %v638, 0.0
        %v822 = vmax.f32 %v641, 0.0
        %v823 = vmax.f32 %v644, 0.0
        %v824 = vmax.f32 %v647, 0.0
        %v825 = vmax.f32 %v650, 0.0
        %v826 = vmax.f32 %v653, 0.0
        %v827 = vmax.f32 %v656, 0.0
        %v828 = vmax.f32 %v659, 0.0
        %v829 = vmax.f32 %v662, 0.0
        %v830 = vmax.f32 %v665, 0.0
        %v831 = vmax.f32 %v668, 0.0
        %v832 = vmax.f32 %v671, 0.0
        %v833 = vmax.f32 %v674, 0.0
        %v834 = vmax.f32 %v677, 0.0
        %v835 = vmax.f32 %v680, 0.0
        %v836 = vmax.f32 %v683, 0.0
        %v837 = vmax.f32 %v686, 0.0
        %v838 = vmax.f32 %v689, 0.0
        %v839 = vmax.f32 %v692, 0.0
        %v840 = vmax.f32 %v695, 0.0
        %v841 = vmax.f32 %v698, 0.0
        %v842 = vmax.f32 %v701, 0.0
        %v843 = vmax.f32 %v704, 0.0
        %v844 = vmax.f32 %v707, 0.0
        %v845 = vmax.f32 %v710, 0.0
        %v846 = vmax.f32 %v713, 0.0
        %v847 = vmax.f32 %v716, 0.0
        %v848 = vmax.f32 %v719, 0.0
        %s849 = scalar_lea.vmem %s1, 128
        %v850 = vld [vmem:[%s849] sm:$0xff]
        %v851 = vld [vmem:[%s849 + $0x8] sm:$0xff]
        %v852 = vld [vmem:[%s849 + $0x10] sm:$0xff]
        %v853 = vld [vmem:[%s849 + $0x18] sm:$0xff]
        %v854 = vld [vmem:[%s849 + $0x20] sm:$0xff]
        %v855 = vld [vmem:[%s849 + $0x28] sm:$0xff]
        %v856 = vld [vmem:[%s849 + $0x30] sm:$0xff]
        %v857 = vld [vmem:[%s849 + $0x38] sm:$0xff]
        %v858 = vld [vmem:[%s849 + $0x40] sm:$0xff]
        %v859 = vld [vmem:[%s849 + $0x48] sm:$0xff]
        %v860 = vld [vmem:[%s849 + $0x50] sm:$0xff]
        %v861 = vld [vmem:[%s849 + $0x58] sm:$0xff]
        %v862 = vld [vmem:[%s849 + $0x60] sm:$0xff]
        %v863 = vld [vmem:[%s849 + $0x68] sm:$0xff]
        %v864 = vld [vmem:[%s849 + $0x70] sm:$0xff]
        %v865 = vld [vmem:[%s849 + $0x78] sm:$0xff]
        %s866 = scalar_lea.vmem %s2, 1
        %v867 = vld [vmem:[%s866] sm:$0x1]
        %v869 = vperm.slane %v867, 0
        %871 = vmatpush.msra.mxu0 %v865
        %872 = vmatpush.msra.mxu0 %v864
        %873 = vmatpush.msra.mxu0 %v863
        %874 = vmatpush.msra.mxu0 %v862
        %875 = vmatpush.msra.mxu0 %v861
        %876 = vmatpush.msra.mxu0 %v860
        %877 = vmatpush.msra.mxu0 %v859
        %878 = vmatpush.msra.mxu0 %v858
        %879 = vmatpush.msra.mxu0 %v857
        %880 = vmatpush.msra.mxu0 %v856
        %881 = vmatpush.msra.mxu0 %v855
        %882 = vmatpush.msra.mxu0 %v854
        %883 = vmatpush.msra.mxu0 %v853
        %884 = vmatpush.msra.mxu0 %v852
        %885 = vmatpush.msra.mxu0 %v851
        %886 = vmatpush.msra.mxu0 %v850
        %887 = vmatmul.f32.gmra.mxu0 %v721
        %v888 = vpop.f32.mrf.mxu0
        %v889 = vadd.f32 %v869, %v888
        %890 = vmatmul.f32.gmra.mxu0 %v722
        %v891 = vpop.f32.mrf.mxu0
        %v892 = vadd.f32 %v869, %v891
        %893 = vmatmul.f32.gmra.mxu0 %v723
        %v894 = vpop.f32.mrf.mxu0
        %v895 = vadd.f32 %v869, %v894
        %896 = vmatmul.f32.gmra.mxu0 %v724
        %v897 = vpop.f32.mrf.mxu0
        %v898 = vadd.f32 %v869, %v897
        %899 = vmatmul.f32.gmra.mxu0 %v725
        %v900 = vpop.f32.mrf.mxu0
        %v901 = vadd.f32 %v869, %v900
        %902 = vmatmul.f32.gmra.mxu0 %v726
        %v903 = vpop.f32.mrf.mxu0
        %v904 = vadd.f32 %v869, %v903
        %905 = vmatmul.f32.gmra.mxu0 %v727
        %v906 = vpop.f32.mrf.mxu0
        %v907 = vadd.f32 %v869, %v906
        %908 = vmatmul.f32.gmra.mxu0 %v728
        %v909 = vpop.f32.mrf.mxu0
        %v910 = vadd.f32 %v869, %v909
        %911 = vmatmul.f32.gmra.mxu0 %v729
        %v912 = vpop.f32.mrf.mxu0
        %v913 = vadd.f32 %v869, %v912
        %914 = vmatmul.f32.gmra.mxu0 %v730
        %v915 = vpop.f32.mrf.mxu0
        %v916 = vadd.f32 %v869, %v915
        %917 = vmatmul.f32.gmra.mxu0 %v731
        %v918 = vpop.f32.mrf.mxu0
        %v919 = vadd.f32 %v869, %v918
        %920 = vmatmul.f32.gmra.mxu0 %v732
        %v921 = vpop.f32.mrf.mxu0
        %v922 = vadd.f32 %v869, %v921
        %923 = vmatmul.f32.gmra.mxu0 %v733
        %v924 = vpop.f32.mrf.mxu0
        %v925 = vadd.f32 %v869, %v924
        %926 = vmatmul.f32.gmra.mxu0 %v734
        %v927 = vpop.f32.mrf.mxu0
        %v928 = vadd.f32 %v869, %v927
        %929 = vmatmul.f32.gmra.mxu0 %v735
        %v930 = vpop.f32.mrf.mxu0
        %v931 = vadd.f32 %v869, %v930
        %932 = vmatmul.f32.gmra.mxu0 %v736
        %v933 = vpop.f32.mrf.mxu0
        %v934 = vadd.f32 %v869, %v933
        %935 = vmatmul.f32.gmra.mxu0 %v737
        %v936 = vpop.f32.mrf.mxu0
        %v937 = vadd.f32 %v869, %v936
        %938 = vmatmul.f32.gmra.mxu0 %v738
        %v939 = vpop.f32.mrf.mxu0
        %v940 = vadd.f32 %v869, %v939
        %941 = vmatmul.f32.gmra.mxu0 %v739
        %v942 = vpop.f32.mrf.mxu0
        %v943 = vadd.f32 %v869, %v942
        %944 = vmatmul.f32.gmra.mxu0 %v740
        %v945 = vpop.f32.mrf.mxu0
        %v946 = vadd.f32 %v869, %v945
        %947 = vmatmul.f32.gmra.mxu0 %v741
        %v948 = vpop.f32.mrf.mxu0
        %v949 = vadd.f32 %v869, %v948
        %950 = vmatmul.f32.gmra.mxu0 %v742
        %v951 = vpop.f32.mrf.mxu0
        %v952 = vadd.f32 %v869, %v951
        %953 = vmatmul.f32.gmra.mxu0 %v743
        %v954 = vpop.f32.mrf.mxu0
        %v955 = vadd.f32 %v869, %v954
        %956 = vmatmul.f32.gmra.mxu0 %v744
        %v957 = vpop.f32.mrf.mxu0
        %v958 = vadd.f32 %v869, %v957
        %959 = vmatmul.f32.gmra.mxu0 %v745
        %v960 = vpop.f32.mrf.mxu0
        %v961 = vadd.f32 %v869, %v960
        %962 = vmatmul.f32.gmra.mxu0 %v746
        %v963 = vpop.f32.mrf.mxu0
        %v964 = vadd.f32 %v869, %v963
        %965 = vmatmul.f32.gmra.mxu0 %v747
        %v966 = vpop.f32.mrf.mxu0
        %v967 = vadd.f32 %v869, %v966
        %968 = vmatmul.f32.gmra.mxu0 %v748
        %v969 = vpop.f32.mrf.mxu0
        %v970 = vadd.f32 %v869, %v969
        %971 = vmatmul.f32.gmra.mxu0 %v749
        %v972 = vpop.f32.mrf.mxu0
        %v973 = vadd.f32 %v869, %v972
        %974 = vmatmul.f32.gmra.mxu0 %v750
        %v975 = vpop.f32.mrf.mxu0
        %v976 = vadd.f32 %v869, %v975
        %977 = vmatmul.f32.gmra.mxu0 %v751
        %v978 = vpop.f32.mrf.mxu0
        %v979 = vadd.f32 %v869, %v978
        %980 = vmatmul.f32.gmra.mxu0 %v752
        %v981 = vpop.f32.mrf.mxu0
        %v982 = vadd.f32 %v869, %v981
        %983 = vmatmul.f32.gmra.mxu0 %v753
        %v984 = vpop.f32.mrf.mxu0
        %v985 = vadd.f32 %v869, %v984
        %986 = vmatmul.f32.gmra.mxu0 %v754
        %v987 = vpop.f32.mrf.mxu0
        %v988 = vadd.f32 %v869, %v987
        %989 = vmatmul.f32.gmra.mxu0 %v755
        %v990 = vpop.f32.mrf.mxu0
        %v991 = vadd.f32 %v869, %v990
        %992 = vmatmul.f32.gmra.mxu0 %v756
        %v993 = vpop.f32.mrf.mxu0
        %v994 = vadd.f32 %v869, %v993
        %995 = vmatmul.f32.gmra.mxu0 %v757
        %v996 = vpop.f32.mrf.mxu0
        %v997 = vadd.f32 %v869, %v996
        %998 = vmatmul.f32.gmra.mxu0 %v758
        %v999 = vpop.f32.mrf.mxu0
        %v1000 = vadd.f32 %v869, %v999
        %1001 = vmatmul.f32.gmra.mxu0 %v759
        %v1002 = vpop.f32.mrf.mxu0
        %v1003 = vadd.f32 %v869, %v1002
        %1004 = vmatmul.f32.gmra.mxu0 %v760
        %v1005 = vpop.f32.mrf.mxu0
        %v1006 = vadd.f32 %v869, %v1005
        %1007 = vmatmul.f32.gmra.mxu0 %v761
        %v1008 = vpop.f32.mrf.mxu0
        %v1009 = vadd.f32 %v869, %v1008
        %1010 = vmatmul.f32.gmra.mxu0 %v762
        %v1011 = vpop.f32.mrf.mxu0
        %v1012 = vadd.f32 %v869, %v1011
        %1013 = vmatmul.f32.gmra.mxu0 %v763
        %v1014 = vpop.f32.mrf.mxu0
        %v1015 = vadd.f32 %v869, %v1014
        %1016 = vmatmul.f32.gmra.mxu0 %v764
        %v1017 = vpop.f32.mrf.mxu0
        %v1018 = vadd.f32 %v869, %v1017
        %1019 = vmatmul.f32.gmra.mxu0 %v765
        %v1020 = vpop.f32.mrf.mxu0
        %v1021 = vadd.f32 %v869, %v1020
        %1022 = vmatmul.f32.gmra.mxu0 %v766
        %v1023 = vpop.f32.mrf.mxu0
        %v1024 = vadd.f32 %v869, %v1023
        %1025 = vmatmul.f32.gmra.mxu0 %v767
        %v1026 = vpop.f32.mrf.mxu0
        %v1027 = vadd.f32 %v869, %v1026
        %1028 = vmatmul.f32.gmra.mxu0 %v768
        %v1029 = vpop.f32.mrf.mxu0
        %v1030 = vadd.f32 %v869, %v1029
        %1031 = vmatmul.f32.gmra.mxu0 %v769
        %v1032 = vpop.f32.mrf.mxu0
        %v1033 = vadd.f32 %v869, %v1032
        %1034 = vmatmul.f32.gmra.mxu0 %v770
        %v1035 = vpop.f32.mrf.mxu0
        %v1036 = vadd.f32 %v869, %v1035
        %1037 = vmatmul.f32.gmra.mxu0 %v771
        %v1038 = vpop.f32.mrf.mxu0
        %v1039 = vadd.f32 %v869, %v1038
        %1040 = vmatmul.f32.gmra.mxu0 %v772
        %v1041 = vpop.f32.mrf.mxu0
        %v1042 = vadd.f32 %v869, %v1041
        %1043 = vmatmul.f32.gmra.mxu0 %v773
        %v1044 = vpop.f32.mrf.mxu0
        %v1045 = vadd.f32 %v869, %v1044
        %1046 = vmatmul.f32.gmra.mxu0 %v774
        %v1047 = vpop.f32.mrf.mxu0
        %v1048 = vadd.f32 %v869, %v1047
        %1049 = vmatmul.f32.gmra.mxu0 %v775
        %v1050 = vpop.f32.mrf.mxu0
        %v1051 = vadd.f32 %v869, %v1050
        %1052 = vmatmul.f32.gmra.mxu0 %v776
        %v1053 = vpop.f32.mrf.mxu0
        %v1054 = vadd.f32 %v869, %v1053
        %1055 = vmatmul.f32.gmra.mxu0 %v777
        %v1056 = vpop.f32.mrf.mxu0
        %v1057 = vadd.f32 %v869, %v1056
        %1058 = vmatmul.f32.gmra.mxu0 %v778
        %v1059 = vpop.f32.mrf.mxu0
        %v1060 = vadd.f32 %v869, %v1059
        %1061 = vmatmul.f32.gmra.mxu0 %v779
        %v1062 = vpop.f32.mrf.mxu0
        %v1063 = vadd.f32 %v869, %v1062
        %1064 = vmatmul.f32.gmra.mxu0 %v780
        %v1065 = vpop.f32.mrf.mxu0
        %v1066 = vadd.f32 %v869, %v1065
        %1067 = vmatmul.f32.gmra.mxu0 %v781
        %v1068 = vpop.f32.mrf.mxu0
        %v1069 = vadd.f32 %v869, %v1068
        %1070 = vmatmul.f32.gmra.mxu0 %v782
        %v1071 = vpop.f32.mrf.mxu0
        %v1072 = vadd.f32 %v869, %v1071
        %1073 = vmatmul.f32.gmra.mxu0 %v783
        %v1074 = vpop.f32.mrf.mxu0
        %v1075 = vadd.f32 %v869, %v1074
        %1076 = vmatmul.f32.gmra.mxu0 %v784
        %v1077 = vpop.f32.mrf.mxu0
        %v1078 = vadd.f32 %v869, %v1077
        %1079 = vmatmul.f32.gmra.mxu0 %v785
        %v1080 = vpop.f32.mrf.mxu0
        %v1081 = vadd.f32 %v869, %v1080
        %1082 = vmatmul.f32.gmra.mxu0 %v786
        %v1083 = vpop.f32.mrf.mxu0
        %v1084 = vadd.f32 %v869, %v1083
        %1085 = vmatmul.f32.gmra.mxu0 %v787
        %v1086 = vpop.f32.mrf.mxu0
        %v1087 = vadd.f32 %v869, %v1086
        %1088 = vmatmul.f32.gmra.mxu0 %v788
        %v1089 = vpop.f32.mrf.mxu0
        %v1090 = vadd.f32 %v869, %v1089
        %1091 = vmatmul.f32.gmra.mxu0 %v789
        %v1092 = vpop.f32.mrf.mxu0
        %v1093 = vadd.f32 %v869, %v1092
        %1094 = vmatmul.f32.gmra.mxu0 %v790
        %v1095 = vpop.f32.mrf.mxu0
        %v1096 = vadd.f32 %v869, %v1095
        %1097 = vmatmul.f32.gmra.mxu0 %v791
        %v1098 = vpop.f32.mrf.mxu0
        %v1099 = vadd.f32 %v869, %v1098
        %1100 = vmatmul.f32.gmra.mxu0 %v792
        %v1101 = vpop.f32.mrf.mxu0
        %v1102 = vadd.f32 %v869, %v1101
        %1103 = vmatmul.f32.gmra.mxu0 %v793
        %v1104 = vpop.f32.mrf.mxu0
        %v1105 = vadd.f32 %v869, %v1104
        %1106 = vmatmul.f32.gmra.mxu0 %v794
        %v1107 = vpop.f32.mrf.mxu0
        %v1108 = vadd.f32 %v869, %v1107
        %1109 = vmatmul.f32.gmra.mxu0 %v795
        %v1110 = vpop.f32.mrf.mxu0
        %v1111 = vadd.f32 %v869, %v1110
        %1112 = vmatmul.f32.gmra.mxu0 %v796
        %v1113 = vpop.f32.mrf.mxu0
        %v1114 = vadd.f32 %v869, %v1113
        %1115 = vmatmul.f32.gmra.mxu0 %v797
        %v1116 = vpop.f32.mrf.mxu0
        %v1117 = vadd.f32 %v869, %v1116
        %1118 = vmatmul.f32.gmra.mxu0 %v798
        %v1119 = vpop.f32.mrf.mxu0
        %v1120 = vadd.f32 %v869, %v1119
        %1121 = vmatmul.f32.gmra.mxu0 %v799
        %v1122 = vpop.f32.mrf.mxu0
        %v1123 = vadd.f32 %v869, %v1122
        %1124 = vmatmul.f32.gmra.mxu0 %v800
        %v1125 = vpop.f32.mrf.mxu0
        %v1126 = vadd.f32 %v869, %v1125
        %1127 = vmatmul.f32.gmra.mxu0 %v801
        %v1128 = vpop.f32.mrf.mxu0
        %v1129 = vadd.f32 %v869, %v1128
        %1130 = vmatmul.f32.gmra.mxu0 %v802
        %v1131 = vpop.f32.mrf.mxu0
        %v1132 = vadd.f32 %v869, %v1131
        %1133 = vmatmul.f32.gmra.mxu0 %v803
        %v1134 = vpop.f32.mrf.mxu0
        %v1135 = vadd.f32 %v869, %v1134
        %1136 = vmatmul.f32.gmra.mxu0 %v804
        %v1137 = vpop.f32.mrf.mxu0
        %v1138 = vadd.f32 %v869, %v1137
        %1139 = vmatmul.f32.gmra.mxu0 %v805
        %v1140 = vpop.f32.mrf.mxu0
        %v1141 = vadd.f32 %v869, %v1140
        %1142 = vmatmul.f32.gmra.mxu0 %v806
        %v1143 = vpop.f32.mrf.mxu0
        %v1144 = vadd.f32 %v869, %v1143
        %1145 = vmatmul.f32.gmra.mxu0 %v807
        %v1146 = vpop.f32.mrf.mxu0
        %v1147 = vadd.f32 %v869, %v1146
        %1148 = vmatmul.f32.gmra.mxu0 %v808
        %v1149 = vpop.f32.mrf.mxu0
        %v1150 = vadd.f32 %v869, %v1149
        %1151 = vmatmul.f32.gmra.mxu0 %v809
        %v1152 = vpop.f32.mrf.mxu0
        %v1153 = vadd.f32 %v869, %v1152
        %1154 = vmatmul.f32.gmra.mxu0 %v810
        %v1155 = vpop.f32.mrf.mxu0
        %v1156 = vadd.f32 %v869, %v1155
        %1157 = vmatmul.f32.gmra.mxu0 %v811
        %v1158 = vpop.f32.mrf.mxu0
        %v1159 = vadd.f32 %v869, %v1158
        %1160 = vmatmul.f32.gmra.mxu0 %v812
        %v1161 = vpop.f32.mrf.mxu0
        %v1162 = vadd.f32 %v869, %v1161
        %1163 = vmatmul.f32.gmra.mxu0 %v813
        %v1164 = vpop.f32.mrf.mxu0
        %v1165 = vadd.f32 %v869, %v1164
        %1166 = vmatmul.f32.gmra.mxu0 %v814
        %v1167 = vpop.f32.mrf.mxu0
        %v1168 = vadd.f32 %v869, %v1167
        %1169 = vmatmul.f32.gmra.mxu0 %v815
        %v1170 = vpop.f32.mrf.mxu0
        %v1171 = vadd.f32 %v869, %v1170
        %1172 = vmatmul.f32.gmra.mxu0 %v816
        %v1173 = vpop.f32.mrf.mxu0
        %v1174 = vadd.f32 %v869, %v1173
        %1175 = vmatmul.f32.gmra.mxu0 %v817
        %v1176 = vpop.f32.mrf.mxu0
        %v1177 = vadd.f32 %v869, %v1176
        %1178 = vmatmul.f32.gmra.mxu0 %v818
        %v1179 = vpop.f32.mrf.mxu0
        %v1180 = vadd.f32 %v869, %v1179
        %1181 = vmatmul.f32.gmra.mxu0 %v819
        %v1182 = vpop.f32.mrf.mxu0
        %v1183 = vadd.f32 %v869, %v1182
        %1184 = vmatmul.f32.gmra.mxu0 %v820
        %v1185 = vpop.f32.mrf.mxu0
        %v1186 = vadd.f32 %v869, %v1185
        %1187 = vmatmul.f32.gmra.mxu0 %v821
        %v1188 = vpop.f32.mrf.mxu0
        %v1189 = vadd.f32 %v869, %v1188
        %1190 = vmatmul.f32.gmra.mxu0 %v822
        %v1191 = vpop.f32.mrf.mxu0
        %v1192 = vadd.f32 %v869, %v1191
        %1193 = vmatmul.f32.gmra.mxu0 %v823
        %v1194 = vpop.f32.mrf.mxu0
        %v1195 = vadd.f32 %v869, %v1194
        %1196 = vmatmul.f32.gmra.mxu0 %v824
        %v1197 = vpop.f32.mrf.mxu0
        %v1198 = vadd.f32 %v869, %v1197
        %1199 = vmatmul.f32.gmra.mxu0 %v825
        %v1200 = vpop.f32.mrf.mxu0
        %v1201 = vadd.f32 %v869, %v1200
        %1202 = vmatmul.f32.gmra.mxu0 %v826
        %v1203 = vpop.f32.mrf.mxu0
        %v1204 = vadd.f32 %v869, %v1203
        %1205 = vmatmul.f32.gmra.mxu0 %v827
        %v1206 = vpop.f32.mrf.mxu0
        %v1207 = vadd.f32 %v869, %v1206
        %1208 = vmatmul.f32.gmra.mxu0 %v828
        %v1209 = vpop.f32.mrf.mxu0
        %v1210 = vadd.f32 %v869, %v1209
        %1211 = vmatmul.f32.gmra.mxu0 %v829
        %v1212 = vpop.f32.mrf.mxu0
        %v1213 = vadd.f32 %v869, %v1212
        %1214 = vmatmul.f32.gmra.mxu0 %v830
        %v1215 = vpop.f32.mrf.mxu0
        %v1216 = vadd.f32 %v869, %v1215
        %1217 = vmatmul.f32.gmra.mxu0 %v831
        %v1218 = vpop.f32.mrf.mxu0
        %v1219 = vadd.f32 %v869, %v1218
        %1220 = vmatmul.f32.gmra.mxu0 %v832
        %v1221 = vpop.f32.mrf.mxu0
        %v1222 = vadd.f32 %v869, %v1221
        %1223 = vmatmul.f32.gmra.mxu0 %v833
        %v1224 = vpop.f32.mrf.mxu0
        %v1225 = vadd.f32 %v869, %v1224
        %1226 = vmatmul.f32.gmra.mxu0 %v834
        %v1227 = vpop.f32.mrf.mxu0
        %v1228 = vadd.f32 %v869, %v1227
        %1229 = vmatmul.f32.gmra.mxu0 %v835
        %v1230 = vpop.f32.mrf.mxu0
        %v1231 = vadd.f32 %v869, %v1230
        %1232 = vmatmul.f32.gmra.mxu0 %v836
        %v1233 = vpop.f32.mrf.mxu0
        %v1234 = vadd.f32 %v869, %v1233
        %1235 = vmatmul.f32.gmra.mxu0 %v837
        %v1236 = vpop.f32.mrf.mxu0
        %v1237 = vadd.f32 %v869, %v1236
        %1238 = vmatmul.f32.gmra.mxu0 %v838
        %v1239 = vpop.f32.mrf.mxu0
        %v1240 = vadd.f32 %v869, %v1239
        %1241 = vmatmul.f32.gmra.mxu0 %v839
        %v1242 = vpop.f32.mrf.mxu0
        %v1243 = vadd.f32 %v869, %v1242
        %1244 = vmatmul.f32.gmra.mxu0 %v840
        %v1245 = vpop.f32.mrf.mxu0
        %v1246 = vadd.f32 %v869, %v1245
        %1247 = vmatmul.f32.gmra.mxu0 %v841
        %v1248 = vpop.f32.mrf.mxu0
        %v1249 = vadd.f32 %v869, %v1248
        %1250 = vmatmul.f32.gmra.mxu0 %v842
        %v1251 = vpop.f32.mrf.mxu0
        %v1252 = vadd.f32 %v869, %v1251
        %1253 = vmatmul.f32.gmra.mxu0 %v843
        %v1254 = vpop.f32.mrf.mxu0
        %v1255 = vadd.f32 %v869, %v1254
        %1256 = vmatmul.f32.gmra.mxu0 %v844
        %v1257 = vpop.f32.mrf.mxu0
        %v1258 = vadd.f32 %v869, %v1257
        %1259 = vmatmul.f32.gmra.mxu0 %v845
        %v1260 = vpop.f32.mrf.mxu0
        %v1261 = vadd.f32 %v869, %v1260
        %1262 = vmatmul.f32.gmra.mxu0 %v846
        %v1263 = vpop.f32.mrf.mxu0
        %v1264 = vadd.f32 %v869, %v1263
        %1265 = vmatmul.f32.gmra.mxu0 %v847
        %v1266 = vpop.f32.mrf.mxu0
        %v1267 = vadd.f32 %v869, %v1266
        %1268 = vmatmul.f32.gmra.mxu0 %v848
        %v1269 = vpop.f32.mrf.mxu0
        %v1270 = vadd.f32 %v869, %v1269
        %1271 = vdwg.mxu0
        %v1272 = vmax.f32 %v889, 0.0
        %v1273 = vmax.f32 %v892, 0.0
        %v1274 = vmax.f32 %v895, 0.0
        %v1275 = vmax.f32 %v898, 0.0
        %v1276 = vmax.f32 %v901, 0.0
        %v1277 = vmax.f32 %v904, 0.0
        %v1278 = vmax.f32 %v907, 0.0
        %v1279 = vmax.f32 %v910, 0.0
        %v1280 = vmax.f32 %v913, 0.0
        %v1281 = vmax.f32 %v916, 0.0
        %v1282 = vmax.f32 %v919, 0.0
        %v1283 = vmax.f32 %v922, 0.0
        %v1284 = vmax.f32 %v925, 0.0
        %v1285 = vmax.f32 %v928, 0.0
        %v1286 = vmax.f32 %v931, 0.0
        %v1287 = vmax.f32 %v934, 0.0
        %v1288 = vmax.f32 %v937, 0.0
        %v1289 = vmax.f32 %v940, 0.0
        %v1290 = vmax.f32 %v943, 0.0
        %v1291 = vmax.f32 %v946, 0.0
        %v1292 = vmax.f32 %v949, 0.0
        %v1293 = vmax.f32 %v952, 0.0
        %v1294 = vmax.f32 %v955, 0.0
        %v1295 = vmax.f32 %v958, 0.0
        %v1296 = vmax.f32 %v961, 0.0
        %v1297 = vmax.f32 %v964, 0.0
        %v1298 = vmax.f32 %v967, 0.0
        %v1299 = vmax.f32 %v970, 0.0
        %v1300 = vmax.f32 %v973, 0.0
        %v1301 = vmax.f32 %v976, 0.0
        %v1302 = vmax.f32 %v979, 0.0
        %v1303 = vmax.f32 %v982, 0.0
        %v1304 = vmax.f32 %v985, 0.0
        %v1305 = vmax.f32 %v988, 0.0
        %v1306 = vmax.f32 %v991, 0.0
        %v1307 = vmax.f32 %v994, 0.0
        %v1308 = vmax.f32 %v997, 0.0
        %v1309 = vmax.f32 %v1000, 0.0
        %v1310 = vmax.f32 %v1003, 0.0
        %v1311 = vmax.f32 %v1006, 0.0
        %v1312 = vmax.f32 %v1009, 0.0
        %v1313 = vmax.f32 %v1012, 0.0
        %v1314 = vmax.f32 %v1015, 0.0
        %v1315 = vmax.f32 %v1018, 0.0
        %v1316 = vmax.f32 %v1021, 0.0
        %v1317 = vmax.f32 %v1024, 0.0
        %v1318 = vmax.f32 %v1027, 0.0
        %v1319 = vmax.f32 %v1030, 0.0
        %v1320 = vmax.f32 %v1033, 0.0
        %v1321 = vmax.f32 %v1036, 0.0
        %v1322 = vmax.f32 %v1039, 0.0
        %v1323 = vmax.f32 %v1042, 0.0
        %v1324 = vmax.f32 %v1045, 0.0
        %v1325 = vmax.f32 %v1048, 0.0
        %v1326 = vmax.f32 %v1051, 0.0
        %v1327 = vmax.f32 %v1054, 0.0
        %v1328 = vmax.f32 %v1057, 0.0
        %v1329 = vmax.f32 %v1060, 0.0
        %v1330 = vmax.f32 %v1063, 0.0
        %v1331 = vmax.f32 %v1066, 0.0
        %v1332 = vmax.f32 %v1069, 0.0
        %v1333 = vmax.f32 %v1072, 0.0
        %v1334 = vmax.f32 %v1075, 0.0
        %v1335 = vmax.f32 %v1078, 0.0
        %v1336 = vmax.f32 %v1081, 0.0
        %v1337 = vmax.f32 %v1084, 0.0
        %v1338 = vmax.f32 %v1087, 0.0
        %v1339 = vmax.f32 %v1090, 0.0
        %v1340 = vmax.f32 %v1093, 0.0
        %v1341 = vmax.f32 %v1096, 0.0
        %v1342 = vmax.f32 %v1099, 0.0
        %v1343 = vmax.f32 %v1102, 0.0
        %v1344 = vmax.f32 %v1105, 0.0
        %v1345 = vmax.f32 %v1108, 0.0
        %v1346 = vmax.f32 %v1111, 0.0
        %v1347 = vmax.f32 %v1114, 0.0
        %v1348 = vmax.f32 %v1117, 0.0
        %v1349 = vmax.f32 %v1120, 0.0
        %v1350 = vmax.f32 %v1123, 0.0
        %v1351 = vmax.f32 %v1126, 0.0
        %v1352 = vmax.f32 %v1129, 0.0
        %v1353 = vmax.f32 %v1132, 0.0
        %v1354 = vmax.f32 %v1135, 0.0
        %v1355 = vmax.f32 %v1138, 0.0
        %v1356 = vmax.f32 %v1141, 0.0
        %v1357 = vmax.f32 %v1144, 0.0
        %v1358 = vmax.f32 %v1147, 0.0
        %v1359 = vmax.f32 %v1150, 0.0
        %v1360 = vmax.f32 %v1153, 0.0
        %v1361 = vmax.f32 %v1156, 0.0
        %v1362 = vmax.f32 %v1159, 0.0
        %v1363 = vmax.f32 %v1162, 0.0
        %v1364 = vmax.f32 %v1165, 0.0
        %v1365 = vmax.f32 %v1168, 0.0
        %v1366 = vmax.f32 %v1171, 0.0
        %v1367 = vmax.f32 %v1174, 0.0
        %v1368 = vmax.f32 %v1177, 0.0
        %v1369 = vmax.f32 %v1180, 0.0
        %v1370 = vmax.f32 %v1183, 0.0
        %v1371 = vmax.f32 %v1186, 0.0
        %v1372 = vmax.f32 %v1189, 0.0
        %v1373 = vmax.f32 %v1192, 0.0
        %v1374 = vmax.f32 %v1195, 0.0
        %v1375 = vmax.f32 %v1198, 0.0
        %v1376 = vmax.f32 %v1201, 0.0
        %v1377 = vmax.f32 %v1204, 0.0
        %v1378 = vmax.f32 %v1207, 0.0
        %v1379 = vmax.f32 %v1210, 0.0
        %v1380 = vmax.f32 %v1213, 0.0
        %v1381 = vmax.f32 %v1216, 0.0
        %v1382 = vmax.f32 %v1219, 0.0
        %v1383 = vmax.f32 %v1222, 0.0
        %v1384 = vmax.f32 %v1225, 0.0
        %v1385 = vmax.f32 %v1228, 0.0
        %v1386 = vmax.f32 %v1231, 0.0
        %v1387 = vmax.f32 %v1234, 0.0
        %v1388 = vmax.f32 %v1237, 0.0
        %v1389 = vmax.f32 %v1240, 0.0
        %v1390 = vmax.f32 %v1243, 0.0
        %v1391 = vmax.f32 %v1246, 0.0
        %v1392 = vmax.f32 %v1249, 0.0
        %v1393 = vmax.f32 %v1252, 0.0
        %v1394 = vmax.f32 %v1255, 0.0
        %v1395 = vmax.f32 %v1258, 0.0
        %v1396 = vmax.f32 %v1261, 0.0
        %v1397 = vmax.f32 %v1264, 0.0
        %v1398 = vmax.f32 %v1267, 0.0
        %v1399 = vmax.f32 %v1270, 0.0
        %s1400 = scalar_lea.vmem %s1, 256
        %v1401 = vld [vmem:[%s1400] sm:$0xff]
        %v1402 = vld [vmem:[%s1400 + $0x8] sm:$0xff]
        %v1403 = vld [vmem:[%s1400 + $0x10] sm:$0xff]
        %v1404 = vld [vmem:[%s1400 + $0x18] sm:$0xff]
        %v1405 = vld [vmem:[%s1400 + $0x20] sm:$0xff]
        %v1406 = vld [vmem:[%s1400 + $0x28] sm:$0xff]
        %v1407 = vld [vmem:[%s1400 + $0x30] sm:$0xff]
        %v1408 = vld [vmem:[%s1400 + $0x38] sm:$0xff]
        %v1409 = vld [vmem:[%s1400 + $0x40] sm:$0xff]
        %v1410 = vld [vmem:[%s1400 + $0x48] sm:$0xff]
        %v1411 = vld [vmem:[%s1400 + $0x50] sm:$0xff]
        %v1412 = vld [vmem:[%s1400 + $0x58] sm:$0xff]
        %v1413 = vld [vmem:[%s1400 + $0x60] sm:$0xff]
        %v1414 = vld [vmem:[%s1400 + $0x68] sm:$0xff]
        %v1415 = vld [vmem:[%s1400 + $0x70] sm:$0xff]
        %v1416 = vld [vmem:[%s1400 + $0x78] sm:$0xff]
        %s1417 = scalar_lea.vmem %s2, 2
        %v1418 = vld [vmem:[%s1417] sm:$0x1]
        %v1420 = vperm.slane %v1418, 0
        %1422 = vmatpush.msra.mxu0 %v1416
        %1423 = vmatpush.msra.mxu0 %v1415
        %1424 = vmatpush.msra.mxu0 %v1414
        %1425 = vmatpush.msra.mxu0 %v1413
        %1426 = vmatpush.msra.mxu0 %v1412
        %1427 = vmatpush.msra.mxu0 %v1411
        %1428 = vmatpush.msra.mxu0 %v1410
        %1429 = vmatpush.msra.mxu0 %v1409
        %1430 = vmatpush.msra.mxu0 %v1408
        %1431 = vmatpush.msra.mxu0 %v1407
        %1432 = vmatpush.msra.mxu0 %v1406
        %1433 = vmatpush.msra.mxu0 %v1405
        %1434 = vmatpush.msra.mxu0 %v1404
        %1435 = vmatpush.msra.mxu0 %v1403
        %1436 = vmatpush.msra.mxu0 %v1402
        %1437 = vmatpush.msra.mxu0 %v1401
        %1438 = vmatmul.f32.gmra.mxu0 %v1272
        %v1439 = vpop.f32.mrf.mxu0
        %v1440 = vadd.f32 %v1420, %v1439
        %1441 = vmatmul.f32.gmra.mxu0 %v1273
        %v1442 = vpop.f32.mrf.mxu0
        %v1443 = vadd.f32 %v1420, %v1442
        %1444 = vmatmul.f32.gmra.mxu0 %v1274
        %v1445 = vpop.f32.mrf.mxu0
        %v1446 = vadd.f32 %v1420, %v1445
        %1447 = vmatmul.f32.gmra.mxu0 %v1275
        %v1448 = vpop.f32.mrf.mxu0
        %v1449 = vadd.f32 %v1420, %v1448
        %1450 = vmatmul.f32.gmra.mxu0 %v1276
        %v1451 = vpop.f32.mrf.mxu0
        %v1452 = vadd.f32 %v1420, %v1451
        %1453 = vmatmul.f32.gmra.mxu0 %v1277
        %v1454 = vpop.f32.mrf.mxu0
        %v1455 = vadd.f32 %v1420, %v1454
        %1456 = vmatmul.f32.gmra.mxu0 %v1278
        %v1457 = vpop.f32.mrf.mxu0
        %v1458 = vadd.f32 %v1420, %v1457
        %1459 = vmatmul.f32.gmra.mxu0 %v1279
        %v1460 = vpop.f32.mrf.mxu0
        %v1461 = vadd.f32 %v1420, %v1460
        %1462 = vmatmul.f32.gmra.mxu0 %v1280
        %v1463 = vpop.f32.mrf.mxu0
        %v1464 = vadd.f32 %v1420, %v1463
        %1465 = vmatmul.f32.gmra.mxu0 %v1281
        %v1466 = vpop.f32.mrf.mxu0
        %v1467 = vadd.f32 %v1420, %v1466
        %1468 = vmatmul.f32.gmra.mxu0 %v1282
        %v1469 = vpop.f32.mrf.mxu0
        %v1470 = vadd.f32 %v1420, %v1469
        %1471 = vmatmul.f32.gmra.mxu0 %v1283
        %v1472 = vpop.f32.mrf.mxu0
        %v1473 = vadd.f32 %v1420, %v1472
        %1474 = vmatmul.f32.gmra.mxu0 %v1284
        %v1475 = vpop.f32.mrf.mxu0
        %v1476 = vadd.f32 %v1420, %v1475
        %1477 = vmatmul.f32.gmra.mxu0 %v1285
        %v1478 = vpop.f32.mrf.mxu0
        %v1479 = vadd.f32 %v1420, %v1478
        %1480 = vmatmul.f32.gmra.mxu0 %v1286
        %v1481 = vpop.f32.mrf.mxu0
        %v1482 = vadd.f32 %v1420, %v1481
        %1483 = vmatmul.f32.gmra.mxu0 %v1287
        %v1484 = vpop.f32.mrf.mxu0
        %v1485 = vadd.f32 %v1420, %v1484
        %1486 = vmatmul.f32.gmra.mxu0 %v1288
        %v1487 = vpop.f32.mrf.mxu0
        %v1488 = vadd.f32 %v1420, %v1487
        %1489 = vmatmul.f32.gmra.mxu0 %v1289
        %v1490 = vpop.f32.mrf.mxu0
        %v1491 = vadd.f32 %v1420, %v1490
        %1492 = vmatmul.f32.gmra.mxu0 %v1290
        %v1493 = vpop.f32.mrf.mxu0
        %v1494 = vadd.f32 %v1420, %v1493
        %1495 = vmatmul.f32.gmra.mxu0 %v1291
        %v1496 = vpop.f32.mrf.mxu0
        %v1497 = vadd.f32 %v1420, %v1496
        %1498 = vmatmul.f32.gmra.mxu0 %v1292
        %v1499 = vpop.f32.mrf.mxu0
        %v1500 = vadd.f32 %v1420, %v1499
        %1501 = vmatmul.f32.gmra.mxu0 %v1293
        %v1502 = vpop.f32.mrf.mxu0
        %v1503 = vadd.f32 %v1420, %v1502
        %1504 = vmatmul.f32.gmra.mxu0 %v1294
        %v1505 = vpop.f32.mrf.mxu0
        %v1506 = vadd.f32 %v1420, %v1505
        %1507 = vmatmul.f32.gmra.mxu0 %v1295
        %v1508 = vpop.f32.mrf.mxu0
        %v1509 = vadd.f32 %v1420, %v1508
        %1510 = vmatmul.f32.gmra.mxu0 %v1296
        %v1511 = vpop.f32.mrf.mxu0
        %v1512 = vadd.f32 %v1420, %v1511
        %1513 = vmatmul.f32.gmra.mxu0 %v1297
        %v1514 = vpop.f32.mrf.mxu0
        %v1515 = vadd.f32 %v1420, %v1514
        %1516 = vmatmul.f32.gmra.mxu0 %v1298
        %v1517 = vpop.f32.mrf.mxu0
        %v1518 = vadd.f32 %v1420, %v1517
        %1519 = vmatmul.f32.gmra.mxu0 %v1299
        %v1520 = vpop.f32.mrf.mxu0
        %v1521 = vadd.f32 %v1420, %v1520
        %1522 = vmatmul.f32.gmra.mxu0 %v1300
        %v1523 = vpop.f32.mrf.mxu0
        %v1524 = vadd.f32 %v1420, %v1523
        %1525 = vmatmul.f32.gmra.mxu0 %v1301
        %v1526 = vpop.f32.mrf.mxu0
        %v1527 = vadd.f32 %v1420, %v1526
        %1528 = vmatmul.f32.gmra.mxu0 %v1302
        %v1529 = vpop.f32.mrf.mxu0
        %v1530 = vadd.f32 %v1420, %v1529
        %1531 = vmatmul.f32.gmra.mxu0 %v1303
        %v1532 = vpop.f32.mrf.mxu0
        %v1533 = vadd.f32 %v1420, %v1532
        %1534 = vmatmul.f32.gmra.mxu0 %v1304
        %v1535 = vpop.f32.mrf.mxu0
        %v1536 = vadd.f32 %v1420, %v1535
        %1537 = vmatmul.f32.gmra.mxu0 %v1305
        %v1538 = vpop.f32.mrf.mxu0
        %v1539 = vadd.f32 %v1420, %v1538
        %1540 = vmatmul.f32.gmra.mxu0 %v1306
        %v1541 = vpop.f32.mrf.mxu0
        %v1542 = vadd.f32 %v1420, %v1541
        %1543 = vmatmul.f32.gmra.mxu0 %v1307
        %v1544 = vpop.f32.mrf.mxu0
        %v1545 = vadd.f32 %v1420, %v1544
        %1546 = vmatmul.f32.gmra.mxu0 %v1308
        %v1547 = vpop.f32.mrf.mxu0
        %v1548 = vadd.f32 %v1420, %v1547
        %1549 = vmatmul.f32.gmra.mxu0 %v1309
        %v1550 = vpop.f32.mrf.mxu0
        %v1551 = vadd.f32 %v1420, %v1550
        %1552 = vmatmul.f32.gmra.mxu0 %v1310
        %v1553 = vpop.f32.mrf.mxu0
        %v1554 = vadd.f32 %v1420, %v1553
        %1555 = vmatmul.f32.gmra.mxu0 %v1311
        %v1556 = vpop.f32.mrf.mxu0
        %v1557 = vadd.f32 %v1420, %v1556
        %1558 = vmatmul.f32.gmra.mxu0 %v1312
        %v1559 = vpop.f32.mrf.mxu0
        %v1560 = vadd.f32 %v1420, %v1559
        %1561 = vmatmul.f32.gmra.mxu0 %v1313
        %v1562 = vpop.f32.mrf.mxu0
        %v1563 = vadd.f32 %v1420, %v1562
        %1564 = vmatmul.f32.gmra.mxu0 %v1314
        %v1565 = vpop.f32.mrf.mxu0
        %v1566 = vadd.f32 %v1420, %v1565
        %1567 = vmatmul.f32.gmra.mxu0 %v1315
        %v1568 = vpop.f32.mrf.mxu0
        %v1569 = vadd.f32 %v1420, %v1568
        %1570 = vmatmul.f32.gmra.mxu0 %v1316
        %v1571 = vpop.f32.mrf.mxu0
        %v1572 = vadd.f32 %v1420, %v1571
        %1573 = vmatmul.f32.gmra.mxu0 %v1317
        %v1574 = vpop.f32.mrf.mxu0
        %v1575 = vadd.f32 %v1420, %v1574
        %1576 = vmatmul.f32.gmra.mxu0 %v1318
        %v1577 = vpop.f32.mrf.mxu0
        %v1578 = vadd.f32 %v1420, %v1577
        %1579 = vmatmul.f32.gmra.mxu0 %v1319
        %v1580 = vpop.f32.mrf.mxu0
        %v1581 = vadd.f32 %v1420, %v1580
        %1582 = vmatmul.f32.gmra.mxu0 %v1320
        %v1583 = vpop.f32.mrf.mxu0
        %v1584 = vadd.f32 %v1420, %v1583
        %1585 = vmatmul.f32.gmra.mxu0 %v1321
        %v1586 = vpop.f32.mrf.mxu0
        %v1587 = vadd.f32 %v1420, %v1586
        %1588 = vmatmul.f32.gmra.mxu0 %v1322
        %v1589 = vpop.f32.mrf.mxu0
        %v1590 = vadd.f32 %v1420, %v1589
        %1591 = vmatmul.f32.gmra.mxu0 %v1323
        %v1592 = vpop.f32.mrf.mxu0
        %v1593 = vadd.f32 %v1420, %v1592
        %1594 = vmatmul.f32.gmra.mxu0 %v1324
        %v1595 = vpop.f32.mrf.mxu0
        %v1596 = vadd.f32 %v1420, %v1595
        %1597 = vmatmul.f32.gmra.mxu0 %v1325
        %v1598 = vpop.f32.mrf.mxu0
        %v1599 = vadd.f32 %v1420, %v1598
        %1600 = vmatmul.f32.gmra.mxu0 %v1326
        %v1601 = vpop.f32.mrf.mxu0
        %v1602 = vadd.f32 %v1420, %v1601
        %1603 = vmatmul.f32.gmra.mxu0 %v1327
        %v1604 = vpop.f32.mrf.mxu0
        %v1605 = vadd.f32 %v1420, %v1604
        %1606 = vmatmul.f32.gmra.mxu0 %v1328
        %v1607 = vpop.f32.mrf.mxu0
        %v1608 = vadd.f32 %v1420, %v1607
        %1609 = vmatmul.f32.gmra.mxu0 %v1329
        %v1610 = vpop.f32.mrf.mxu0
        %v1611 = vadd.f32 %v1420, %v1610
        %1612 = vmatmul.f32.gmra.mxu0 %v1330
        %v1613 = vpop.f32.mrf.mxu0
        %v1614 = vadd.f32 %v1420, %v1613
        %1615 = vmatmul.f32.gmra.mxu0 %v1331
        %v1616 = vpop.f32.mrf.mxu0
        %v1617 = vadd.f32 %v1420, %v1616
        %1618 = vmatmul.f32.gmra.mxu0 %v1332
        %v1619 = vpop.f32.mrf.mxu0
        %v1620 = vadd.f32 %v1420, %v1619
        %1621 = vmatmul.f32.gmra.mxu0 %v1333
        %v1622 = vpop.f32.mrf.mxu0
        %v1623 = vadd.f32 %v1420, %v1622
        %1624 = vmatmul.f32.gmra.mxu0 %v1334
        %v1625 = vpop.f32.mrf.mxu0
        %v1626 = vadd.f32 %v1420, %v1625
        %1627 = vmatmul.f32.gmra.mxu0 %v1335
        %v1628 = vpop.f32.mrf.mxu0
        %v1629 = vadd.f32 %v1420, %v1628
        %1630 = vmatmul.f32.gmra.mxu0 %v1336
        %v1631 = vpop.f32.mrf.mxu0
        %v1632 = vadd.f32 %v1420, %v1631
        %1633 = vmatmul.f32.gmra.mxu0 %v1337
        %v1634 = vpop.f32.mrf.mxu0
        %v1635 = vadd.f32 %v1420, %v1634
        %1636 = vmatmul.f32.gmra.mxu0 %v1338
        %v1637 = vpop.f32.mrf.mxu0
        %v1638 = vadd.f32 %v1420, %v1637
        %1639 = vmatmul.f32.gmra.mxu0 %v1339
        %v1640 = vpop.f32.mrf.mxu0
        %v1641 = vadd.f32 %v1420, %v1640
        %1642 = vmatmul.f32.gmra.mxu0 %v1340
        %v1643 = vpop.f32.mrf.mxu0
        %v1644 = vadd.f32 %v1420, %v1643
        %1645 = vmatmul.f32.gmra.mxu0 %v1341
        %v1646 = vpop.f32.mrf.mxu0
        %v1647 = vadd.f32 %v1420, %v1646
        %1648 = vmatmul.f32.gmra.mxu0 %v1342
        %v1649 = vpop.f32.mrf.mxu0
        %v1650 = vadd.f32 %v1420, %v1649
        %1651 = vmatmul.f32.gmra.mxu0 %v1343
        %v1652 = vpop.f32.mrf.mxu0
        %v1653 = vadd.f32 %v1420, %v1652
        %1654 = vmatmul.f32.gmra.mxu0 %v1344
        %v1655 = vpop.f32.mrf.mxu0
        %v1656 = vadd.f32 %v1420, %v1655
        %1657 = vmatmul.f32.gmra.mxu0 %v1345
        %v1658 = vpop.f32.mrf.mxu0
        %v1659 = vadd.f32 %v1420, %v1658
        %1660 = vmatmul.f32.gmra.mxu0 %v1346
        %v1661 = vpop.f32.mrf.mxu0
        %v1662 = vadd.f32 %v1420, %v1661
        %1663 = vmatmul.f32.gmra.mxu0 %v1347
        %v1664 = vpop.f32.mrf.mxu0
        %v1665 = vadd.f32 %v1420, %v1664
        %1666 = vmatmul.f32.gmra.mxu0 %v1348
        %v1667 = vpop.f32.mrf.mxu0
        %v1668 = vadd.f32 %v1420, %v1667
        %1669 = vmatmul.f32.gmra.mxu0 %v1349
        %v1670 = vpop.f32.mrf.mxu0
        %v1671 = vadd.f32 %v1420, %v1670
        %1672 = vmatmul.f32.gmra.mxu0 %v1350
        %v1673 = vpop.f32.mrf.mxu0
        %v1674 = vadd.f32 %v1420, %v1673
        %1675 = vmatmul.f32.gmra.mxu0 %v1351
        %v1676 = vpop.f32.mrf.mxu0
        %v1677 = vadd.f32 %v1420, %v1676
        %1678 = vmatmul.f32.gmra.mxu0 %v1352
        %v1679 = vpop.f32.mrf.mxu0
        %v1680 = vadd.f32 %v1420, %v1679
        %1681 = vmatmul.f32.gmra.mxu0 %v1353
        %v1682 = vpop.f32.mrf.mxu0
        %v1683 = vadd.f32 %v1420, %v1682
        %1684 = vmatmul.f32.gmra.mxu0 %v1354
        %v1685 = vpop.f32.mrf.mxu0
        %v1686 = vadd.f32 %v1420, %v1685
        %1687 = vmatmul.f32.gmra.mxu0 %v1355
        %v1688 = vpop.f32.mrf.mxu0
        %v1689 = vadd.f32 %v1420, %v1688
        %1690 = vmatmul.f32.gmra.mxu0 %v1356
        %v1691 = vpop.f32.mrf.mxu0
        %v1692 = vadd.f32 %v1420, %v1691
        %1693 = vmatmul.f32.gmra.mxu0 %v1357
        %v1694 = vpop.f32.mrf.mxu0
        %v1695 = vadd.f32 %v1420, %v1694
        %1696 = vmatmul.f32.gmra.mxu0 %v1358
        %v1697 = vpop.f32.mrf.mxu0
        %v1698 = vadd.f32 %v1420, %v1697
        %1699 = vmatmul.f32.gmra.mxu0 %v1359
        %v1700 = vpop.f32.mrf.mxu0
        %v1701 = vadd.f32 %v1420, %v1700
        %1702 = vmatmul.f32.gmra.mxu0 %v1360
        %v1703 = vpop.f32.mrf.mxu0
        %v1704 = vadd.f32 %v1420, %v1703
        %1705 = vmatmul.f32.gmra.mxu0 %v1361
        %v1706 = vpop.f32.mrf.mxu0
        %v1707 = vadd.f32 %v1420, %v1706
        %1708 = vmatmul.f32.gmra.mxu0 %v1362
        %v1709 = vpop.f32.mrf.mxu0
        %v1710 = vadd.f32 %v1420, %v1709
        %1711 = vmatmul.f32.gmra.mxu0 %v1363
        %v1712 = vpop.f32.mrf.mxu0
        %v1713 = vadd.f32 %v1420, %v1712
        %1714 = vmatmul.f32.gmra.mxu0 %v1364
        %v1715 = vpop.f32.mrf.mxu0
        %v1716 = vadd.f32 %v1420, %v1715
        %1717 = vmatmul.f32.gmra.mxu0 %v1365
        %v1718 = vpop.f32.mrf.mxu0
        %v1719 = vadd.f32 %v1420, %v1718
        %1720 = vmatmul.f32.gmra.mxu0 %v1366
        %v1721 = vpop.f32.mrf.mxu0
        %v1722 = vadd.f32 %v1420, %v1721
        %1723 = vmatmul.f32.gmra.mxu0 %v1367
        %v1724 = vpop.f32.mrf.mxu0
        %v1725 = vadd.f32 %v1420, %v1724
        %1726 = vmatmul.f32.gmra.mxu0 %v1368
        %v1727 = vpop.f32.mrf.mxu0
        %v1728 = vadd.f32 %v1420, %v1727
        %1729 = vmatmul.f32.gmra.mxu0 %v1369
        %v1730 = vpop.f32.mrf.mxu0
        %v1731 = vadd.f32 %v1420, %v1730
        %1732 = vmatmul.f32.gmra.mxu0 %v1370
        %v1733 = vpop.f32.mrf.mxu0
        %v1734 = vadd.f32 %v1420, %v1733
        %1735 = vmatmul.f32.gmra.mxu0 %v1371
        %v1736 = vpop.f32.mrf.mxu0
        %v1737 = vadd.f32 %v1420, %v1736
        %1738 = vmatmul.f32.gmra.mxu0 %v1372
        %v1739 = vpop.f32.mrf.mxu0
        %v1740 = vadd.f32 %v1420, %v1739
        %1741 = vmatmul.f32.gmra.mxu0 %v1373
        %v1742 = vpop.f32.mrf.mxu0
        %v1743 = vadd.f32 %v1420, %v1742
        %1744 = vmatmul.f32.gmra.mxu0 %v1374
        %v1745 = vpop.f32.mrf.mxu0
        %v1746 = vadd.f32 %v1420, %v1745
        %1747 = vmatmul.f32.gmra.mxu0 %v1375
        %v1748 = vpop.f32.mrf.mxu0
        %v1749 = vadd.f32 %v1420, %v1748
        %1750 = vmatmul.f32.gmra.mxu0 %v1376
        %v1751 = vpop.f32.mrf.mxu0
        %v1752 = vadd.f32 %v1420, %v1751
        %1753 = vmatmul.f32.gmra.mxu0 %v1377
        %v1754 = vpop.f32.mrf.mxu0
        %v1755 = vadd.f32 %v1420, %v1754
        %1756 = vmatmul.f32.gmra.mxu0 %v1378
        %v1757 = vpop.f32.mrf.mxu0
        %v1758 = vadd.f32 %v1420, %v1757
        %1759 = vmatmul.f32.gmra.mxu0 %v1379
        %v1760 = vpop.f32.mrf.mxu0
        %v1761 = vadd.f32 %v1420, %v1760
        %1762 = vmatmul.f32.gmra.mxu0 %v1380
        %v1763 = vpop.f32.mrf.mxu0
        %v1764 = vadd.f32 %v1420, %v1763
        %1765 = vmatmul.f32.gmra.mxu0 %v1381
        %v1766 = vpop.f32.mrf.mxu0
        %v1767 = vadd.f32 %v1420, %v1766
        %1768 = vmatmul.f32.gmra.mxu0 %v1382
        %v1769 = vpop.f32.mrf.mxu0
        %v1770 = vadd.f32 %v1420, %v1769
        %1771 = vmatmul.f32.gmra.mxu0 %v1383
        %v1772 = vpop.f32.mrf.mxu0
        %v1773 = vadd.f32 %v1420, %v1772
        %1774 = vmatmul.f32.gmra.mxu0 %v1384
        %v1775 = vpop.f32.mrf.mxu0
        %v1776 = vadd.f32 %v1420, %v1775
        %1777 = vmatmul.f32.gmra.mxu0 %v1385
        %v1778 = vpop.f32.mrf.mxu0
        %v1779 = vadd.f32 %v1420, %v1778
        %1780 = vmatmul.f32.gmra.mxu0 %v1386
        %v1781 = vpop.f32.mrf.mxu0
        %v1782 = vadd.f32 %v1420, %v1781
        %1783 = vmatmul.f32.gmra.mxu0 %v1387
        %v1784 = vpop.f32.mrf.mxu0
        %v1785 = vadd.f32 %v1420, %v1784
        %1786 = vmatmul.f32.gmra.mxu0 %v1388
        %v1787 = vpop.f32.mrf.mxu0
        %v1788 = vadd.f32 %v1420, %v1787
        %1789 = vmatmul.f32.gmra.mxu0 %v1389
        %v1790 = vpop.f32.mrf.mxu0
        %v1791 = vadd.f32 %v1420, %v1790
        %1792 = vmatmul.f32.gmra.mxu0 %v1390
        %v1793 = vpop.f32.mrf.mxu0
        %v1794 = vadd.f32 %v1420, %v1793
        %1795 = vmatmul.f32.gmra.mxu0 %v1391
        %v1796 = vpop.f32.mrf.mxu0
        %v1797 = vadd.f32 %v1420, %v1796
        %1798 = vmatmul.f32.gmra.mxu0 %v1392
        %v1799 = vpop.f32.mrf.mxu0
        %v1800 = vadd.f32 %v1420, %v1799
        %1801 = vmatmul.f32.gmra.mxu0 %v1393
        %v1802 = vpop.f32.mrf.mxu0
        %v1803 = vadd.f32 %v1420, %v1802
        %1804 = vmatmul.f32.gmra.mxu0 %v1394
        %v1805 = vpop.f32.mrf.mxu0
        %v1806 = vadd.f32 %v1420, %v1805
        %1807 = vmatmul.f32.gmra.mxu0 %v1395
        %v1808 = vpop.f32.mrf.mxu0
        %v1809 = vadd.f32 %v1420, %v1808
        %1810 = vmatmul.f32.gmra.mxu0 %v1396
        %v1811 = vpop.f32.mrf.mxu0
        %v1812 = vadd.f32 %v1420, %v1811
        %1813 = vmatmul.f32.gmra.mxu0 %v1397
        %v1814 = vpop.f32.mrf.mxu0
        %v1815 = vadd.f32 %v1420, %v1814
        %1816 = vmatmul.f32.gmra.mxu0 %v1398
        %v1817 = vpop.f32.mrf.mxu0
        %v1818 = vadd.f32 %v1420, %v1817
        %1819 = vmatmul.f32.gmra.mxu0 %v1399
        %v1820 = vpop.f32.mrf.mxu0
        %v1821 = vadd.f32 %v1420, %v1820
        %1822 = vdwg.mxu0
        %1823 = vst [vmem:[%s164] sm:$0xff] %v1440
        %1824 = vst [vmem:[%s164 + $0x8] sm:$0xff] %v1443
        %1825 = vst [vmem:[%s164 + $0x10] sm:$0xff] %v1446
        %1826 = vst [vmem:[%s164 + $0x18] sm:$0xff] %v1449
        %1827 = vst [vmem:[%s164 + $0x20] sm:$0xff] %v1452
        %1828 = vst [vmem:[%s164 + $0x28] sm:$0xff] %v1455
        %1829 = vst [vmem:[%s164 + $0x30] sm:$0xff] %v1458
        %1830 = vst [vmem:[%s164 + $0x38] sm:$0xff] %v1461
        %1831 = vst [vmem:[%s164 + $0x40] sm:$0xff] %v1464
        %1832 = vst [vmem:[%s164 + $0x48] sm:$0xff] %v1467
        %1833 = vst [vmem:[%s164 + $0x50] sm:$0xff] %v1470
        %1834 = vst [vmem:[%s164 + $0x58] sm:$0xff] %v1473
        %1835 = vst [vmem:[%s164 + $0x60] sm:$0xff] %v1476
        %1836 = vst [vmem:[%s164 + $0x68] sm:$0xff] %v1479
        %1837 = vst [vmem:[%s164 + $0x70] sm:$0xff] %v1482
        %1838 = vst [vmem:[%s164 + $0x78] sm:$0xff] %v1485
        %1839 = vst [vmem:[%s164 + $0x80] sm:$0xff] %v1488
        %1840 = vst [vmem:[%s164 + $0x88] sm:$0xff] %v1491
        %1841 = vst [vmem:[%s164 + $0x90] sm:$0xff] %v1494
        %1842 = vst [vmem:[%s164 + $0x98] sm:$0xff] %v1497
        %1843 = vst [vmem:[%s164 + $0xa0] sm:$0xff] %v1500
        %1844 = vst [vmem:[%s164 + $0xa8] sm:$0xff] %v1503
        %1845 = vst [vmem:[%s164 + $0xb0] sm:$0xff] %v1506
        %1846 = vst [vmem:[%s164 + $0xb8] sm:$0xff] %v1509
        %1847 = vst [vmem:[%s164 + $0xc0] sm:$0xff] %v1512
        %1848 = vst [vmem:[%s164 + $0xc8] sm:$0xff] %v1515
        %1849 = vst [vmem:[%s164 + $0xd0] sm:$0xff] %v1518
        %1850 = vst [vmem:[%s164 + $0xd8] sm:$0xff] %v1521
        %1851 = vst [vmem:[%s164 + $0xe0] sm:$0xff] %v1524
        %1852 = vst [vmem:[%s164 + $0xe8] sm:$0xff] %v1527
        %1853 = vst [vmem:[%s164 + $0xf0] sm:$0xff] %v1530
        %1854 = vst [vmem:[%s164 + $0xf8] sm:$0xff] %v1533
        %1855 = vst [vmem:[%s164 + $0x100] sm:$0xff] %v1536
        %1856 = vst [vmem:[%s164 + $0x108] sm:$0xff] %v1539
        %1857 = vst [vmem:[%s164 + $0x110] sm:$0xff] %v1542
        %1858 = vst [vmem:[%s164 + $0x118] sm:$0xff] %v1545
        %1859 = vst [vmem:[%s164 + $0x120] sm:$0xff] %v1548
        %1860 = vst [vmem:[%s164 + $0x128] sm:$0xff] %v1551
        %1861 = vst [vmem:[%s164 + $0x130] sm:$0xff] %v1554
        %1862 = vst [vmem:[%s164 + $0x138] sm:$0xff] %v1557
        %1863 = vst [vmem:[%s164 + $0x140] sm:$0xff] %v1560
        %1864 = vst [vmem:[%s164 + $0x148] sm:$0xff] %v1563
        %1865 = vst [vmem:[%s164 + $0x150] sm:$0xff] %v1566
        %1866 = vst [vmem:[%s164 + $0x158] sm:$0xff] %v1569
        %1867 = vst [vmem:[%s164 + $0x160] sm:$0xff] %v1572
        %1868 = vst [vmem:[%s164 + $0x168] sm:$0xff] %v1575
        %1869 = vst [vmem:[%s164 + $0x170] sm:$0xff] %v1578
        %1870 = vst [vmem:[%s164 + $0x178] sm:$0xff] %v1581
        %1871 = vst [vmem:[%s164 + $0x180] sm:$0xff] %v1584
        %1872 = vst [vmem:[%s164 + $0x188] sm:$0xff] %v1587
        %1873 = vst [vmem:[%s164 + $0x190] sm:$0xff] %v1590
        %1874 = vst [vmem:[%s164 + $0x198] sm:$0xff] %v1593
        %1875 = vst [vmem:[%s164 + $0x1a0] sm:$0xff] %v1596
        %1876 = vst [vmem:[%s164 + $0x1a8] sm:$0xff] %v1599
        %1877 = vst [vmem:[%s164 + $0x1b0] sm:$0xff] %v1602
        %1878 = vst [vmem:[%s164 + $0x1b8] sm:$0xff] %v1605
        %1879 = vst [vmem:[%s164 + $0x1c0] sm:$0xff] %v1608
        %1880 = vst [vmem:[%s164 + $0x1c8] sm:$0xff] %v1611
        %1881 = vst [vmem:[%s164 + $0x1d0] sm:$0xff] %v1614
        %1882 = vst [vmem:[%s164 + $0x1d8] sm:$0xff] %v1617
        %1883 = vst [vmem:[%s164 + $0x1e0] sm:$0xff] %v1620
        %1884 = vst [vmem:[%s164 + $0x1e8] sm:$0xff] %v1623
        %1885 = vst [vmem:[%s164 + $0x1f0] sm:$0xff] %v1626
        %1886 = vst [vmem:[%s164 + $0x1f8] sm:$0xff] %v1629
        %1887 = vst [vmem:[%s164 + $0x200] sm:$0xff] %v1632
        %1888 = vst [vmem:[%s164 + $0x208] sm:$0xff] %v1635
        %1889 = vst [vmem:[%s164 + $0x210] sm:$0xff] %v1638
        %1890 = vst [vmem:[%s164 + $0x218] sm:$0xff] %v1641
        %1891 = vst [vmem:[%s164 + $0x220] sm:$0xff] %v1644
        %1892 = vst [vmem:[%s164 + $0x228] sm:$0xff] %v1647
        %1893 = vst [vmem:[%s164 + $0x230] sm:$0xff] %v1650
        %1894 = vst [vmem:[%s164 + $0x238] sm:$0xff] %v1653
        %1895 = vst [vmem:[%s164 + $0x240] sm:$0xff] %v1656
        %1896 = vst [vmem:[%s164 + $0x248] sm:$0xff] %v1659
        %1897 = vst [vmem:[%s164 + $0x250] sm:$0xff] %v1662
        %1898 = vst [vmem:[%s164 + $0x258] sm:$0xff] %v1665
        %1899 = vst [vmem:[%s164 + $0x260] sm:$0xff] %v1668
        %1900 = vst [vmem:[%s164 + $0x268] sm:$0xff] %v1671
        %1901 = vst [vmem:[%s164 + $0x270] sm:$0xff] %v1674
        %1902 = vst [vmem:[%s164 + $0x278] sm:$0xff] %v1677
        %1903 = vst [vmem:[%s164 + $0x280] sm:$0xff] %v1680
        %1904 = vst [vmem:[%s164 + $0x288] sm:$0xff] %v1683
        %1905 = vst [vmem:[%s164 + $0x290] sm:$0xff] %v1686
        %1906 = vst [vmem:[%s164 + $0x298] sm:$0xff] %v1689
        %1907 = vst [vmem:[%s164 + $0x2a0] sm:$0xff] %v1692
        %1908 = vst [vmem:[%s164 + $0x2a8] sm:$0xff] %v1695
        %1909 = vst [vmem:[%s164 + $0x2b0] sm:$0xff] %v1698
        %1910 = vst [vmem:[%s164 + $0x2b8] sm:$0xff] %v1701
        %1911 = vst [vmem:[%s164 + $0x2c0] sm:$0xff] %v1704
        %1912 = vst [vmem:[%s164 + $0x2c8] sm:$0xff] %v1707
        %1913 = vst [vmem:[%s164 + $0x2d0] sm:$0xff] %v1710
        %1914 = vst [vmem:[%s164 + $0x2d8] sm:$0xff] %v1713
        %1915 = vst [vmem:[%s164 + $0x2e0] sm:$0xff] %v1716
        %1916 = vst [vmem:[%s164 + $0x2e8] sm:$0xff] %v1719
        %1917 = vst [vmem:[%s164 + $0x2f0] sm:$0xff] %v1722
        %1918 = vst [vmem:[%s164 + $0x2f8] sm:$0xff] %v1725
        %1919 = vst [vmem:[%s164 + $0x300] sm:$0xff] %v1728
        %1920 = vst [vmem:[%s164 + $0x308] sm:$0xff] %v1731
        %1921 = vst [vmem:[%s164 + $0x310] sm:$0xff] %v1734
        %1922 = vst [vmem:[%s164 + $0x318] sm:$0xff] %v1737
        %1923 = vst [vmem:[%s164 + $0x320] sm:$0xff] %v1740
        %1924 = vst [vmem:[%s164 + $0x328] sm:$0xff] %v1743
        %1925 = vst [vmem:[%s164 + $0x330] sm:$0xff] %v1746
        %1926 = vst [vmem:[%s164 + $0x338] sm:$0xff] %v1749
        %1927 = vst [vmem:[%s164 + $0x340] sm:$0xff] %v1752
        %1928 = vst [vmem:[%s164 + $0x348] sm:$0xff] %v1755
        %1929 = vst [vmem:[%s164 + $0x350] sm:$0xff] %v1758
        %1930 = vst [vmem:[%s164 + $0x358] sm:$0xff] %v1761
        %1931 = vst [vmem:[%s164 + $0x360] sm:$0xff] %v1764
        %1932 = vst [vmem:[%s164 + $0x368] sm:$0xff] %v1767
        %1933 = vst [vmem:[%s164 + $0x370] sm:$0xff] %v1770
        %1934 = vst [vmem:[%s164 + $0x378] sm:$0xff] %v1773
        %1935 = vst [vmem:[%s164 + $0x380] sm:$0xff] %v1776
        %1936 = vst [vmem:[%s164 + $0x388] sm:$0xff] %v1779
        %1937 = vst [vmem:[%s164 + $0x390] sm:$0xff] %v1782
        %1938 = vst [vmem:[%s164 + $0x398] sm:$0xff] %v1785
        %1939 = vst [vmem:[%s164 + $0x3a0] sm:$0xff] %v1788
        %1940 = vst [vmem:[%s164 + $0x3a8] sm:$0xff] %v1791
        %1941 = vst [vmem:[%s164 + $0x3b0] sm:$0xff] %v1794
        %1942 = vst [vmem:[%s164 + $0x3b8] sm:$0xff] %v1797
        %1943 = vst [vmem:[%s164 + $0x3c0] sm:$0xff] %v1800
        %1944 = vst [vmem:[%s164 + $0x3c8] sm:$0xff] %v1803
        %1945 = vst [vmem:[%s164 + $0x3d0] sm:$0xff] %v1806
        %1946 = vst [vmem:[%s164 + $0x3d8] sm:$0xff] %v1809
        %1947 = vst [vmem:[%s164 + $0x3e0] sm:$0xff] %v1812
        %1948 = vst [vmem:[%s164 + $0x3e8] sm:$0xff] %v1815
        %1949 = vst [vmem:[%s164 + $0x3f0] sm:$0xff] %v1818
        %1950 = vst [vmem:[%s164 + $0x3f8] sm:$0xff] %v1821
        %s1951 = sand.u32 %s93, 1
        %s1952 = scalar_lea.sflag [#allocation3], %s1951
        %s1953 = sand.u32 %s93, 1
        %s1954 = smul.addr %s1953, 1024
        %s1955 = scalar_lea.vmem [#allocation2], %s1954
        // Predicated region
        $region33: #{full_connected_conv3d_pallas.1} parent=31 // pred_check
          %p1956 = pneg %p103
        $region34: #{full_connected_conv3d_pallas.1} parent=31 // pred_check_branch
          %1958 = sbr.rel (%p1956) target = $region36
        $region35: #{full_connected_conv3d_pallas.1} parent=31 // pred_region
          %s1959 = smul.u32 128, %s17
          %1961 = vsyncadd %s1952, 0
          %s1962 = smul.addr %s1959, 8
          %s1963 = scalar_lea.hbm %s3, %s1962
          %s1964 = sshll.u32 %s1955, 4
          %s1965 = int_to_ptr.vmem [resolvable:$true] %s1964
          %s1966 = sshll.u32 %s1963, 4
          %s1967 = int_to_ptr.hbm [resolvable:$true] %s1966
          %1972 = dma.vmem_to_hbm [thread:$0]  %s1965, 16384, %s1967, %s1952, 128, 128, 8
        $region36: #{full_connected_conv3d_pallas.1} parent=31 // pred_fallthru
          _
      $region32: #{full_connected_conv3d_pallas.1} parent=5 // pred_fallthru
        _
      %p1973 = scmp.le.s32.totalorder 2, %s12
      // Predicated region
      $region37: #{full_connected_conv3d_pallas.1} parent=5 // pred_check
        %p1974 = pneg %p1973
      $region38: #{full_connected_conv3d_pallas.1} parent=5 // pred_check_branch
        %1976 = sbr.rel (%p1974) target = $region40
      $region39: #{full_connected_conv3d_pallas.1} parent=5 // pred_region
        %s1977 = ssub.s32 %s12, 2
        // Predicated region
        $region41: #{full_connected_conv3d_pallas.1} parent=39 // pred_check
          %p1978 = pneg %p109
        $region42: #{full_connected_conv3d_pallas.1} parent=39 // pred_check_branch
          %1980 = sbr.rel (%p1978) target = $region44
        $region43: #{full_connected_conv3d_pallas.1} parent=39 // pred_region
          %s1981 = sand.u32 %s94, 1
          %s1982 = scalar_lea.sflag [#allocation3], %s1981
          %s1983 = sand.u32 %s94, 1
          %s1984 = smul.addr %s1983, 1024
          %s1985 = scalar_lea.vmem [#allocation2], %s1984
          %1987 = dma.done %s1982, 16384
        $region44: #{full_connected_conv3d_pallas.1} parent=39 // pred_fallthru
          _
      $region40: #{full_connected_conv3d_pallas.1} parent=5 // pred_fallthru
        _
    $region6: #{full_connected_conv3d_pallas.1} parent=1 // loop_footer
      %s16 = sadd.s32 1, %s12
    $region7: #{full_connected_conv3d_pallas.1} parent=1 // loop_footer_branch
      %11 = sbr.rel target = $region3
    $region8: #{full_connected_conv3d_pallas.1} parent=1 // loop_exit
      _
    %1988 = vsyncpa [#allocation3], 1
    %s1989 = scalar_lea.sflag [#allocation3], 1
    %1990 = vsyncpa %s1989, 1

</llo_original>
